<compile_context>
chip_gen: v6e
topology: v6e:2x2x1
jax: 0.10.0
libtpu: 0.0.40
codegen_flags: <defaults>
</compile_context>

<pallas_src>
import functools
import math

import jax
import jax.numpy as jnp
from jax.experimental import pallas as pl
from jax.experimental.pallas import tpu as pltpu


def _round_up(a, m):
    return ((a + m - 1) // m) * m


def _hl_kernel(adj_ref, hs_ref, s_src_ref, s_dst_ref, d_dst_ref,
               w_out_ref, b_out_ref,
               out_ref,
               z_acc,
               *, p_neg, num_heads):
    j = pl.program_id(1)
    nj = pl.num_programs(1)

    # Reset the per-head z accumulators at the first src tile of every dst tile.
    @pl.when(j == 0)
    def _():
        z_acc[...] = jnp.zeros_like(z_acc)

    # 0/1 adjacency mask: int8 HBM stream -> gate dtype.  Hoisted out of the head loop so
    # the tile is loaded/converted once regardless of num_heads.  (int8 -> f32 -> bf16 uses
    # only conversions guaranteed to lower on all TPU generations.)
    gate_dtype = s_dst_ref.dtype
    adj_m = adj_ref[...].astype(jnp.float32)
    if jnp.dtype(gate_dtype) != jnp.dtype(jnp.float32):
        adj_m = adj_m.astype(gate_dtype)

    # Static unroll over heads: all heads share the (tile_nd, tile_ns) adjacency tile.
    for h in range(num_heads):
        gate = s_dst_ref[h] + s_src_ref[h]                    # (tile_nd, 1)+(1, tile_ns)
        # relu(where(g > 0, g, -p*g)) == max(g, -p*g): both branches are >= 0.
        g = jnp.maximum(gate, (-p_neg) * gate) * adj_m
        z_acc[h] += jnp.dot(g, hs_ref[h], preferred_element_type=jnp.float32)

    # Last src tile: apply dst-side deg^-0.5 and the per-head out_linear slices; single
    # store of the (lane-narrow) output block per dst tile.
    @pl.when(j == nj - 1)
    def _():
        d_dst = d_dst_ref[...]                                # (tile_nd, 1) f32
        acc = jnp.broadcast_to(b_out_ref[...], out_ref.shape)
        for h in range(num_heads):
            zh = (d_dst * z_acc[h]).astype(w_out_ref.dtype)
            acc = acc + jnp.dot(zh, w_out_ref[h], preferred_element_type=jnp.float32)
        out_ref[...] = acc


@functools.partial(jax.jit,
                   static_argnames=('freq', 'compute_dtype', 'dst_block', 'src_block'))
def hl_layer_forward(x, adj, d, params, *, freq='low',
                     compute_dtype=jnp.float32,
                     dst_block=512, src_block=1024):
    N, in_dim = x.shape
    num_heads, _, out_dim = params['w_in_h'].shape
    p_neg = 0.1 if freq == 'low' else 0.5
    compute_dtype = jnp.dtype(compute_dtype)
    hp = jax.lax.Precision.HIGHEST

    assert dst_block % 32 == 0, "dst_block must be a multiple of 32 (int8 adj sublanes)"
    assert src_block % 128 == 0, "src_block must be a multiple of 128 (lane tile)"

    # ---- tiling of the (dst, src) node plane ----
    tile_ns = min(src_block, _round_up(N, 128))               # lane tile (mult of 128)
    n_pad = _round_up(N, tile_ns)
    tile_nd = math.gcd(n_pad, min(dst_block, n_pad))          # divides n_pad, mult of 32
    gi, gj = n_pad // tile_nd, n_pad // tile_ns

    # ---- algebraic pre-folding of the attention-gate path (tiny, once) ----
    # att = h @ W_att + b_att is only consumed through att @ w_gd / att @ w_gs.
    v_d = jnp.matmul(params['w_att_h'], params['w_gd_h'], precision=hp)    # (H, D, 1)
    v_s = jnp.matmul(params['w_att_h'], params['w_gs_h'], precision=hp)    # (H, D, 1)
    c_g = (jnp.matmul(params['b_att_h'], params['w_gd_h'], precision=hp)
           + jnp.matmul(params['b_att_h'], params['w_gs_h'], precision=hp)
           + params['b_g_h'])                                              # (H, 1, 1)
    # freq == 'high' negates the aggregated message; fold the sign into W_out.
    w_out_eff = params['w_out_h'] if freq == 'low' else -params['w_out_h']

    # ---- pad the node axis so tiles divide evenly (padded nodes: d = 0, no edges) ----
    pad = n_pad - N
    if pad:
        x = jnp.pad(x, ((0, pad), (0, 0)))
        adj = jnp.pad(adj, ((0, pad), (0, pad)))
        d = jnp.pad(d, ((0, pad), (0, 0)))

    # ---- per-node, per-head precompute: O(N*H*D), negligible vs the N^2 core ----
    hid = jnp.maximum(
        jnp.einsum('ni,hio->hno', x, params['w_in_h'], precision=hp) + params['b_in_h'],
        0.0)                                                               # (H, n_pad, D) f32
    hs = (d[None, :, :] * hid).astype(compute_dtype)                       # src feats * deg^-0.5
    s_dst = (jnp.einsum('hnd,hdk->hnk', hid, v_d, precision=hp) + c_g
             ).astype(compute_dtype)                                       # (H, n_pad, 1)
    s_src = jnp.swapaxes(
        jnp.einsum('hnd,hdk->hnk', hid, v_s, precision=hp), 1, 2
        ).astype(compute_dtype)                                            # (H, 1, n_pad)

    adj_i8 = (adj > 0).astype(jnp.int8)          # 0/1 mask: 1 byte/edge on the HBM stream
    d_f = d.astype(jnp.float32)
    w_out_c = w_out_eff.astype(compute_dtype)                              # (H, D, D)
    b_out_f = params['b_out'].astype(jnp.float32)

    kernel = functools.partial(_hl_kernel, p_neg=p_neg, num_heads=num_heads)

    item = compute_dtype.itemsize
    cost = pl.CostEstimate(
        flops=int(2 * num_heads * n_pad * n_pad * out_dim        # g @ hs aggregation
                  + 5 * num_heads * n_pad * n_pad                # gate chain (VPU plane)
                  + 2 * n_pad * num_heads * out_dim * out_dim),  # epilogue projections
        transcendentals=0,
        bytes_accessed=int(n_pad * n_pad                                   # adj int8, once
                           + gi * num_heads * n_pad * out_dim * item      # hs per dst tile
                           + num_heads * n_pad * item * (gi + gj)         # s_dst / s_src
                           + n_pad * out_dim * 4 + n_pad * 4),
    )

    out_pad = pl.pallas_call(
        kernel,
        out_shape=jax.ShapeDtypeStruct((n_pad, out_dim), jnp.float32),
        grid_spec=pltpu.PrefetchScalarGridSpec(
            num_scalar_prefetch=0,
            grid=(gi, gj),
            in_specs=[
                pl.BlockSpec((tile_nd, tile_ns), lambda i, j: (i, j)),              # adj (int8)
                pl.BlockSpec((num_heads, tile_ns, out_dim), lambda i, j: (0, j, 0)),  # hs (src)
                pl.BlockSpec((num_heads, 1, tile_ns), lambda i, j: (0, 0, j)),      # s_src
                pl.BlockSpec((num_heads, tile_nd, 1), lambda i, j: (0, i, 0)),      # s_dst
                pl.BlockSpec((tile_nd, 1), lambda i, j: (i, 0)),                    # d (dst)
                pl.BlockSpec((num_heads, out_dim, out_dim), lambda i, j: (0, 0, 0)),  # W_out
                pl.BlockSpec((1, out_dim), lambda i, j: (0, 0)),                    # b_out
            ],
            out_specs=pl.BlockSpec((tile_nd, out_dim), lambda i, j: (i, 0)),
            scratch_shapes=[
                pltpu.VMEM((num_heads, tile_nd, out_dim), jnp.float32),  # per-head z acc
            ],
        ),
        compiler_params=pltpu.CompilerParams(
            # dst tiles are independent -> "parallel"; src tiles accumulate into the
            # resident scratch / output block -> "arbitrary".
            dimension_semantics=("parallel", "arbitrary"),
            vmem_limit_bytes=32 * 1024 * 1024,
        ),
        cost_estimate=cost,
    )(adj_i8, hs, s_src, s_dst, d_f, w_out_c, b_out_f)

    return out_pad[:N]


def ref_forward(x, adj, d, params, *, freq='low'):
    """Pure-JAX reference mirroring the PyTorch semantics (dropout = identity)."""
    num_heads, in_dim, out_dim = params['w_in_h'].shape
    p_neg = 0.1 if freq == 'low' else 0.5
    zs = []
    for hd in range(num_heads):
        h = jnp.maximum(x @ params['w_in_h'][hd] + params['b_in_h'][hd], 0.0)
        att = h @ params['w_att_h'][hd] + params['b_att_h'][hd]
        s_dst = att @ params['w_gd_h'][hd]
        s_src = att @ params['w_gs_h'][hd]
        _h = s_dst + s_src.T + params['b_g_h'][hd]
        _g = jnp.where(_h > 0.0, _h, -p_neg * _h)
        if freq == 'high':
            _g = -_g
        alpha = _g * d * d.T * adj
        zs.append((alpha @ h) @ params['w_out_h'][hd])
    return sum(zs) + params['b_out']


def make_params(key, in_dim, out_dim, num_heads):
    """Deterministic xavier-normal(gain=1.414)-style init, biases zero."""
    def xavier(k, shape, fan_in, fan_out, gain=1.414):
        std = gain * (2.0 / (fan_in + fan_out)) ** 0.5
        return std * jax.random.normal(k, shape, dtype=jnp.float32)

    ks = jax.random.split(key, 4)
    # in_linear: torch weight (H*D, in_dim); stored transposed & split by head.
    w_in = xavier(ks[0], (num_heads * out_dim, in_dim), in_dim, num_heads * out_dim)
    w_in_h = jnp.transpose(w_in.T.reshape(in_dim, num_heads, out_dim), (1, 0, 2))
    b_in_h = jnp.zeros((num_heads, 1, out_dim), jnp.float32)
    # att_gates[h]: torch weight (D, D); stored transposed per head.
    w_att = xavier(ks[1], (num_heads, out_dim, out_dim), out_dim, out_dim)
    w_att_h = jnp.transpose(w_att, (0, 2, 1))
    b_att_h = jnp.zeros((num_heads, 1, out_dim), jnp.float32)
    # gates[h]: torch weight (1, 2D) -> split into dst / src halves, stored as (D, 1).
    w_gate = xavier(ks[2], (num_heads, 1, 2 * out_dim), 2 * out_dim, 1)
    w_gd_h = jnp.transpose(w_gate[:, :, :out_dim], (0, 2, 1))
    w_gs_h = jnp.transpose(w_gate[:, :, out_dim:], (0, 2, 1))
    b_g_h = jnp.zeros((num_heads, 1, 1), jnp.float32)
    # out_linear: torch weight (D, H*D); transposed & split by head (z is head-major).
    w_out = xavier(ks[3], (out_dim, num_heads * out_dim), num_heads * out_dim, out_dim)
    w_out_h = w_out.T.reshape(num_heads, out_dim, out_dim)
    b_out = jnp.zeros((1, out_dim), jnp.float32)
    return dict(w_in_h=w_in_h, b_in_h=b_in_h, w_att_h=w_att_h, b_att_h=b_att_h,
                w_gd_h=w_gd_h, w_gs_h=w_gs_h, b_g_h=b_g_h,
                w_out_h=w_out_h, b_out=b_out)


if __name__ == "__main__":
    N, in_dim, out_dim, num_heads = 200, 16, 32, 2

    key = jax.random.PRNGKey(0)
    k_x, k_adj, k_p = jax.random.split(key, 3)

    x = jax.random.normal(k_x, (N, in_dim), dtype=jnp.float32)

    # Deterministic random graph with self-loops; adj[dst, src].
    adj = (jax.random.uniform(k_adj, (N, N)) < 0.05).astype(jnp.float32)
    adj = jnp.maximum(adj, jnp.eye(N, dtype=jnp.float32))
    deg = adj.sum(axis=1, keepdims=True)          # in-degree per dst node
    d = deg ** -0.5                               # (N, 1)

    params = make_params(k_p, in_dim, out_dim, num_heads)

    # Small dst/src blocks -> exercises multi-tile (4 x 2 grid) + padding (200 -> 256).
    run_tiled = functools.partial(hl_layer_forward, dst_block=64, src_block=128)

    for freq in ('low', 'high'):
        out = jax.block_until_ready(run_tiled(x, adj, d, params, freq=freq))
        expected = ref_forward(x, adj, d, params, freq=freq)
        assert out.shape == (N, out_dim)
        assert jnp.allclose(out, expected, atol=3e-4, rtol=3e-4), \
            f"mismatch ({freq}) vs JAX reference"

    expected = ref_forward(x, adj, d, params, freq='low')

    # Default (large-block) f32 path: single 256x256 tile.
    out_def = jax.block_until_ready(hl_layer_forward(x, adj, d, params, freq='low'))
    assert jnp.allclose(out_def, expected, atol=3e-4, rtol=3e-4), \
        "mismatch (default blocks) vs JAX reference"

    # bf16 MXU-operand / bf16 gate-chain fast path; f32 accumulation, looser tolerance.
    out_bf16 = jax.block_until_ready(
        hl_layer_forward(x, adj, d, params, freq='low', compute_dtype=jnp.bfloat16))
    assert out_bf16.shape == (N, out_dim)
    assert bool(jnp.all(jnp.isfinite(out_bf16)))
    max_err = float(jnp.max(jnp.abs(out_bf16 - expected)))
    scale = float(jnp.max(jnp.abs(expected))) + 1e-6
    assert max_err <= 0.05 * scale, f"bf16 path error too large: {max_err} vs {scale}"

    print("KERNEL_OK")
</pallas_src>

<mosaic_0001>
module attributes {stable_mosaic.version = 11 : i64} {
  func.func @_hl_kernel(%arg0: i32, %arg1: i32, %arg2: memref<64x128xi8, #tpu.memory_space<vmem>>, %arg3: memref<2x128x32xf32, #tpu.memory_space<vmem>>, %arg4: memref<2x1x128xf32, #tpu.memory_space<vmem>>, %arg5: memref<2x64x1xf32, #tpu.memory_space<vmem>>, %arg6: memref<64x1xf32, #tpu.memory_space<vmem>>, %arg7: memref<2x32x32xf32, #tpu.memory_space<vmem>>, %arg8: memref<1x32xf32, #tpu.memory_space<vmem>>, %arg9: memref<64x32xf32, #tpu.memory_space<vmem>>, %arg10: memref<2x64x32xf32, #tpu.memory_space<vmem>>) attributes {dimension_semantics = [#tpu.dimension_semantics<parallel>, #tpu.dimension_semantics<arbitrary>], iteration_bounds = array<i64: 4, 2>, scalar_prefetch = 0 : i64, scratch_operands = 1 : i64, tpu.core_type = #tpu.core_type<tc>, window_params = [{transform_indices = @transform_0, window_bounds = array<i64: 64, 128>}, {transform_indices = @transform_1, window_bounds = array<i64: 2, 128, 32>}, {transform_indices = @transform_2, window_bounds = array<i64: 2, 1, 128>}, {transform_indices = @transform_3, window_bounds = array<i64: 2, 64, 1>}, {transform_indices = @transform_4, window_bounds = array<i64: 64, 1>}, {pipeline_mode = #tpu.pipeline_mode<synchronous>, transform_indices = @transform_5, window_bounds = array<i64: 2, 32, 32>}, {pipeline_mode = #tpu.pipeline_mode<synchronous>, transform_indices = @transform_6, window_bounds = array<i64: 1, 32>}, {transform_indices = @transform_7, window_bounds = array<i64: 64, 32>}]} {
    %c0_i32 = arith.constant 0 : i32
    %0 = arith.cmpi eq, %arg1, %c0_i32 : i32
    %1 = arith.extui %0 : i1 to i32
    %c0_i32_0 = arith.constant 0 : i32
    %2 = arith.cmpi ne, %1, %c0_i32_0 : i32
    scf.if %2 {
      %cst_35 = arith.constant 0.000000e+00 : f32
      %48 = vector.broadcast %cst_35 : f32 to vector<2x64x32xf32>
      %c0_36 = arith.constant 0 : index
      %c0_37 = arith.constant 0 : index
      %c0_38 = arith.constant 0 : index
      %49 = vector.load %arg10[%c0_36, %c0_37, %c0_38] : memref<2x64x32xf32, #tpu.memory_space<vmem>>, vector<2x64x32xf32>
      tpu.vector_store %arg10[%c0_36, %c0_37, %c0_38], %48 {strides = array<i32>} : memref<2x64x32xf32, #tpu.memory_space<vmem>>, vector<2x64x32xf32>,
    } else {
    }
    %c0 = arith.constant 0 : index
    %c0_1 = arith.constant 0 : index
    %3 = vector.load %arg2[%c0, %c0_1] : memref<64x128xi8, #tpu.memory_space<vmem>>, vector<64x128xi8>
    %4 = arith.sitofp %3 : vector<64x128xi8> to vector<64x128xf32>
    %c0_2 = arith.constant 0 : index
    %c0_3 = arith.constant 0 : index
    %c0_4 = arith.constant 0 : index
    %5 = vector.load %arg5[%c0_2, %c0_3, %c0_4] : memref<2x64x1xf32, #tpu.memory_space<vmem>>, vector<1x64x1xf32>
    %6 = vector.shape_cast %5 : vector<1x64x1xf32> to vector<64x1xf32>
    %c0_5 = arith.constant 0 : index
    %c0_6 = arith.constant 0 : index
    %c0_7 = arith.constant 0 : index
    %7 = vector.load %arg4[%c0_5, %c0_6, %c0_7] : memref<2x1x128xf32, #tpu.memory_space<vmem>>, vector<1x1x128xf32>
    %8 = vector.shape_cast %7 : vector<1x1x128xf32> to vector<1x128xf32>
    %9 = vector.broadcast %6 : vector<64x1xf32> to vector<64x128xf32>
    %10 = vector.broadcast %8 : vector<1x128xf32> to vector<64x128xf32>
    %11 = arith.addf %9, %10 : vector<64x128xf32>
    %cst = arith.constant -1.000000e-01 : f32
    %12 = vector.broadcast %cst : f32 to vector<64x128xf32>
    %13 = arith.mulf %12, %11 : vector<64x128xf32>
    %14 = arith.maximumf %11, %13 : vector<64x128xf32>
    %15 = arith.mulf %14, %4 : vector<64x128xf32>
    %c0_8 = arith.constant 0 : index
    %c0_9 = arith.constant 0 : index
    %c0_10 = arith.constant 0 : index
    %16 = vector.load %arg10[%c0_8, %c0_9, %c0_10] : memref<2x64x32xf32, #tpu.memory_space<vmem>>, vector<1x64x32xf32>
    %17 = vector.shape_cast %16 : vector<1x64x32xf32> to vector<64x32xf32>
    %c0_11 = arith.constant 0 : index
    %c0_12 = arith.constant 0 : index
    %c0_13 = arith.constant 0 : index
    %18 = vector.load %arg3[%c0_11, %c0_12, %c0_13] : memref<2x128x32xf32, #tpu.memory_space<vmem>>, vector<1x128x32xf32>
    %19 = vector.shape_cast %18 : vector<1x128x32xf32> to vector<128x32xf32>
    %cst_14 = arith.constant dense<0.000000e+00> : vector<64x32xf32>
    %20 = tpu.matmul %15, %19, %cst_14 {dimension_numbers = #tpu.dot_dimension_numbers<[1], [0], [0], [1], [0, 0, 1, 1], [], []>} : vector<64x128xf32>, vector<128x32xf32>, vector<64x32xf32> -> vector<64x32xf32>
    %21 = arith.addf %17, %20 : vector<64x32xf32>
    %c0_15 = arith.constant 0 : index
    %c0_16 = arith.constant 0 : index
    %c0_17 = arith.constant 0 : index
    %22 = vector.load %arg10[%c0_15, %c0_16, %c0_17] : memref<2x64x32xf32, #tpu.memory_space<vmem>>, vector<1x64x32xf32>
    %23 = vector.shape_cast %22 : vector<1x64x32xf32> to vector<64x32xf32>
    %24 = vector.shape_cast %21 : vector<64x32xf32> to vector<1x64x32xf32>
    tpu.vector_store %arg10[%c0_15, %c0_16, %c0_17], %24 {strides = array<i32>} : memref<2x64x32xf32, #tpu.memory_space<vmem>>, vector<1x64x32xf32>,
    %c1 = arith.constant 1 : index
    %c0_18 = arith.constant 0 : index
    %c0_19 = arith.constant 0 : index
    %25 = vector.load %arg5[%c1, %c0_18, %c0_19] : memref<2x64x1xf32, #tpu.memory_space<vmem>>, vector<1x64x1xf32>
    %26 = vector.shape_cast %25 : vector<1x64x1xf32> to vector<64x1xf32>
    %c1_20 = arith.constant 1 : index
    %c0_21 = arith.constant 0 : index
    %c0_22 = arith.constant 0 : index
    %27 = vector.load %arg4[%c1_20, %c0_21, %c0_22] : memref<2x1x128xf32, #tpu.memory_space<vmem>>, vector<1x1x128xf32>
    %28 = vector.shape_cast %27 : vector<1x1x128xf32> to vector<1x128xf32>
    %29 = vector.broadcast %26 : vector<64x1xf32> to vector<64x128xf32>
    %30 = vector.broadcast %28 : vector<1x128xf32> to vector<64x128xf32>
    %31 = arith.addf %29, %30 : vector<64x128xf32>
    %cst_23 = arith.constant -1.000000e-01 : f32
    %32 = vector.broadcast %cst_23 : f32 to vector<64x128xf32>
    %33 = arith.mulf %32, %31 : vector<64x128xf32>
    %34 = arith.maximumf %31, %33 : vector<64x128xf32>
    %35 = arith.mulf %34, %4 : vector<64x128xf32>
    %c1_24 = arith.constant 1 : index
    %c0_25 = arith.constant 0 : index
    %c0_26 = arith.constant 0 : index
    %36 = vector.load %arg10[%c1_24, %c0_25, %c0_26] : memref<2x64x32xf32, #tpu.memory_space<vmem>>, vector<1x64x32xf32>
    %37 = vector.shape_cast %36 : vector<1x64x32xf32> to vector<64x32xf32>
    %c1_27 = arith.constant 1 : index
    %c0_28 = arith.constant 0 : index
    %c0_29 = arith.constant 0 : index
    %38 = vector.load %arg3[%c1_27, %c0_28, %c0_29] : memref<2x128x32xf32, #tpu.memory_space<vmem>>, vector<1x128x32xf32>
    %39 = vector.shape_cast %38 : vector<1x128x32xf32> to vector<128x32xf32>
    %cst_30 = arith.constant dense<0.000000e+00> : vector<64x32xf32>
    %40 = tpu.matmul %35, %39, %cst_30 {dimension_numbers = #tpu.dot_dimension_numbers<[1], [0], [0], [1], [0, 0, 1, 1], [], []>} : vector<64x128xf32>, vector<128x32xf32>, vector<64x32xf32> -> vector<64x32xf32>
    %41 = arith.addf %37, %40 : vector<64x32xf32>
    %c1_31 = arith.constant 1 : index
    %c0_32 = arith.constant 0 : index
    %c0_33 = arith.constant 0 : index
    %42 = vector.load %arg10[%c1_31, %c0_32, %c0_33] : memref<2x64x32xf32, #tpu.memory_space<vmem>>, vector<1x64x32xf32>
    %43 = vector.shape_cast %42 : vector<1x64x32xf32> to vector<64x32xf32>
    %44 = vector.shape_cast %41 : vector<64x32xf32> to vector<1x64x32xf32>
    tpu.vector_store %arg10[%c1_31, %c0_32, %c0_33], %44 {strides = array<i32>} : memref<2x64x32xf32, #tpu.memory_space<vmem>>, vector<1x64x32xf32>,
    %c1_i32 = arith.constant 1 : i32
    %45 = arith.cmpi eq, %arg1, %c1_i32 : i32
    %46 = arith.extui %45 : i1 to i32
    %c0_i32_34 = arith.constant 0 : i32
    %47 = arith.cmpi ne, %46, %c0_i32_34 : i32
    scf.if %47 {
      %c0_35 = arith.constant 0 : index
      %c0_36 = arith.constant 0 : index
      %48 = vector.load %arg6[%c0_35, %c0_36] : memref<64x1xf32, #tpu.memory_space<vmem>>, vector<64x1xf32>
      %c0_37 = arith.constant 0 : index
      %c0_38 = arith.constant 0 : index
      %49 = vector.load %arg8[%c0_37, %c0_38] : memref<1x32xf32, #tpu.memory_space<vmem>>, vector<1x32xf32>
      %50 = vector.shape_cast %49 : vector<1x32xf32> to vector<1x32xf32>
      %51 = vector.broadcast %50 : vector<1x32xf32> to vector<64x32xf32>
      %c0_39 = arith.constant 0 : index
      %c0_40 = arith.constant 0 : index
      %c0_41 = arith.constant 0 : index
      %52 = vector.load %arg10[%c0_39, %c0_40, %c0_41] : memref<2x64x32xf32, #tpu.memory_space<vmem>>, vector<1x64x32xf32>
      %53 = vector.shape_cast %52 : vector<1x64x32xf32> to vector<64x32xf32>
      %54 = vector.broadcast %48 : vector<64x1xf32> to vector<64x32xf32>
      %55 = arith.mulf %54, %53 : vector<64x32xf32>
      %c0_42 = arith.constant 0 : index
      %c0_43 = arith.constant 0 : index
      %c0_44 = arith.constant 0 : index
      %56 = vector.load %arg7[%c0_42, %c0_43, %c0_44] : memref<2x32x32xf32, #tpu.memory_space<vmem>>, vector<1x32x32xf32>
      %57 = vector.shape_cast %56 : vector<1x32x32xf32> to vector<32x32xf32>
      %cst_45 = arith.constant dense<0.000000e+00> : vector<64x32xf32>
      %58 = tpu.matmul %55, %57, %cst_45 {dimension_numbers = #tpu.dot_dimension_numbers<[1], [0], [0], [1], [0, 0, 1, 1], [], []>} : vector<64x32xf32>, vector<32x32xf32>, vector<64x32xf32> -> vector<64x32xf32>
      %59 = arith.addf %51, %58 : vector<64x32xf32>
      %c1_46 = arith.constant 1 : index
      %c0_47 = arith.constant 0 : index
      %c0_48 = arith.constant 0 : index
      %60 = vector.load %arg10[%c1_46, %c0_47, %c0_48] : memref<2x64x32xf32, #tpu.memory_space<vmem>>, vector<1x64x32xf32>
      %61 = vector.shape_cast %60 : vector<1x64x32xf32> to vector<64x32xf32>
      %62 = vector.broadcast %48 : vector<64x1xf32> to vector<64x32xf32>
      %63 = arith.mulf %62, %61 : vector<64x32xf32>
      %c1_49 = arith.constant 1 : index
      %c0_50 = arith.constant 0 : index
      %c0_51 = arith.constant 0 : index
      %64 = vector.load %arg7[%c1_49, %c0_50, %c0_51] : memref<2x32x32xf32, #tpu.memory_space<vmem>>, vector<1x32x32xf32>
      %65 = vector.shape_cast %64 : vector<1x32x32xf32> to vector<32x32xf32>
      %cst_52 = arith.constant dense<0.000000e+00> : vector<64x32xf32>
      %66 = tpu.matmul %63, %65, %cst_52 {dimension_numbers = #tpu.dot_dimension_numbers<[1], [0], [0], [1], [0, 0, 1, 1], [], []>} : vector<64x32xf32>, vector<32x32xf32>, vector<64x32xf32> -> vector<64x32xf32>
      %67 = arith.addf %59, %66 : vector<64x32xf32>
      %c0_53 = arith.constant 0 : index
      %c0_54 = arith.constant 0 : index
      %68 = vector.load %arg9[%c0_53, %c0_54] : memref<64x32xf32, #tpu.memory_space<vmem>>, vector<64x32xf32>
      tpu.vector_store %arg9[%c0_53, %c0_54], %67 {strides = array<i32>} : memref<64x32xf32, #tpu.memory_space<vmem>>, vector<64x32xf32>,
    } else {
    }
    return
  }
  func.func @transform_0(%arg0: i32, %arg1: i32) -> (i32, i32) {
    %c0_i32 = arith.constant 0 : i32
    return %arg0, %arg1 : i32, i32
  }
  func.func @transform_1(%arg0: i32, %arg1: i32) -> (i32, i32, i32) {
    %c0_i32 = arith.constant 0 : i32
    %c0_i32_0 = arith.constant 0 : i32
    %c0_i32_1 = arith.constant 0 : i32
    return %c0_i32, %arg1, %c0_i32_0 : i32, i32, i32
  }
  func.func @transform_2(%arg0: i32, %arg1: i32) -> (i32, i32, i32) {
    %c0_i32 = arith.constant 0 : i32
    %c0_i32_0 = arith.constant 0 : i32
    %c0_i32_1 = arith.constant 0 : i32
    return %c0_i32, %c0_i32_0, %arg1 : i32, i32, i32
  }
  func.func @transform_3(%arg0: i32, %arg1: i32) -> (i32, i32, i32) {
    %c0_i32 = arith.constant 0 : i32
    %c0_i32_0 = arith.constant 0 : i32
    %c0_i32_1 = arith.constant 0 : i32
    return %c0_i32, %arg0, %c0_i32_0 : i32, i32, i32
  }
  func.func @transform_4(%arg0: i32, %arg1: i32) -> (i32, i32) {
    %c0_i32 = arith.constant 0 : i32
    %c0_i32_0 = arith.constant 0 : i32
    return %arg0, %c0_i32 : i32, i32
  }
  func.func @transform_5(%arg0: i32, %arg1: i32) -> (i32, i32, i32) {
    %c0_i32 = arith.constant 0 : i32
    %c0_i32_0 = arith.constant 0 : i32
    %c0_i32_1 = arith.constant 0 : i32
    %c0_i32_2 = arith.constant 0 : i32
    return %c0_i32, %c0_i32_0, %c0_i32_1 : i32, i32, i32
  }
  func.func @transform_6(%arg0: i32, %arg1: i32) -> (i32, i32) {
    %c0_i32 = arith.constant 0 : i32
    %c0_i32_0 = arith.constant 0 : i32
    %c0_i32_1 = arith.constant 0 : i32
    return %c0_i32, %c0_i32_0 : i32, i32
  }
  func.func @transform_7(%arg0: i32, %arg1: i32) -> (i32, i32) {
    %c0_i32 = arith.constant 0 : i32
    %c0_i32_0 = arith.constant 0 : i32
    return %arg0, %c0_i32 : i32, i32
  }
}

</mosaic_0001>

<llo_original>
// kernel: hl_layer_forward.1
$region0: #{hl_layer_forward.1}
  #allocation0 [shape = 'u32[]', space=smem, size = 0x4, offset = 0x4, fixed_abs, tag = 'smem constant byte address 0x4 - core index']
  #allocation1 [shape = 'u32[144,128]{1,0:T(1,128)}', space=vmem, size = 0x12000, scoped, tag = 'internal scratch']
  #allocation2 [shape = 'f32[2,64,32]{2,1,0:T(8,128)}', space=vmem, size = 0x10000, scoped, tag = 'scratch operand']
  %s0 = inlined_call_operand.vmem [shape: s8[256,256], index: 0, kind: input, shape index: {}]
  %s1 = inlined_call_operand.vmem [shape: f32[2,256,32], index: 1, kind: input, shape index: {}]
  %s2 = inlined_call_operand.vmem [shape: f32[2,1,256], index: 2, kind: input, shape index: {}]
  %s3 = inlined_call_operand.vmem [shape: f32[2,256,1], index: 3, kind: input, shape index: {}]
  %s4 = inlined_call_operand.vmem [shape: f32[256,1], index: 4, kind: input, shape index: {}]
  %s5 = inlined_call_operand.vmem [shape: f32[2,32,32], index: 5, kind: input, shape index: {}]
  %s6 = inlined_call_operand.vmem [shape: f32[1,32], index: 6, kind: input, shape index: {}]
  %s7 = inlined_call_operand.vmem [shape: f32[256,32], index: 7, kind: output, shape index: {}]
  %s8 = sld [smem:[#allocation0]]
  $region217: #{hl_layer_forward.1} parent=0
    _
  %s10 = ssub.s32 1, %s8
  %s11 = scalar_select 0, %s10, %s8
  $region1: #{hl_layer_forward.1} parent=0
    #allocation3 [shape = 'u8[16384]{0}', space=vmem, size = 0x4000, scoped, tag = 'input window, operand 0']
    #allocation4 [shape = 'u8[262144]{0}', space=vmem, size = 0x40000, scoped, tag = 'input window, operand 1']
    #allocation5 [shape = 'u8[2048]{0}', space=vmem, size = 0x800, scoped, tag = 'input window, operand 2']
    #allocation6 [shape = 'u8[131072]{0}', space=vmem, size = 0x20000, scoped, tag = 'input window, operand 3']
    loop: start=0, step=1, limit=10
    $region2: #{hl_layer_forward.1} parent=1 // loop_pre_header
      _
    $region3: #{hl_layer_forward.1} parent=1 // loop_header
      %s13 = sphi 0, %s17
      %p14 = scmp.ge.s32.totalorder %s13, 10
      %s20 = sphi 0, %s32
      %s21 = sphi 0, %s28
      %s22 = sphi 0, %s20
      %s23 = sphi 0, %s21
      %s24 = sphi 0, %s22
      %s25 = sphi 0, %s23
      %s37 = sphi 0, %s39
      %s40 = sphi 0, %s37
      %s41 = sphi 0, %s40
      %s57 = sphi 0, %s41
      %s63 = sphi 0, %s65
      %s66 = sphi 0, %s63
      %s67 = sphi 0, %s66
      %s83 = sphi 0, %s67
      %s89 = sphi 0, %s91
      %s92 = sphi 0, %s89
      %s93 = sphi 0, %s92
      %s109 = sphi 0, %s93
      %s115 = sphi 0, %s117
      %s118 = sphi 0, %s115
      %s119 = sphi 0, %s118
      %s135 = sphi 0, %s119
      %s141 = sphi 0, %s143
      %s144 = sphi 0, %s141
      %s145 = sphi 0, %s144
      %s161 = sphi 0, %s145
      %s165 = sphi 0, %s165
      %s167 = sphi 0, %s165
      %s168 = sphi 0, %s167
      %s182 = sphi 0, %s168
      %s186 = sphi 0, %s186
      %s188 = sphi 0, %s186
      %s189 = sphi 0, %s188
      %s203 = sphi 0, %s189
      %s209 = sphi 0, %s211
      %s212 = sphi 0, %s209
      %s213 = sphi 0, %s212
      %s229 = sphi 0, %s213
    $region4: #{hl_layer_forward.1} parent=1 // loop_header_branch
      %16 = sbr.rel (%p14) target = $region8
    $region5: #{hl_layer_forward.1} parent=1 // loop_body
      %s18 = ssub.s32 %s13, 1
      %s19 = ssub.s32 %s13, 2
      %s26 = sadd.s32 1, %s21
      %p27 = scmp.ge.s32.totalorder %s26, 2
      %s28 = scalar_select %p27, 0, %s26
      %s29 = sadd.s32 1, %s20
      %s30 = scalar_select %p27, %s29, %s20
      %p31 = scmp.ge.s32.totalorder %s30, 4
      %s32 = scalar_select %p31, 0, %s30
      %s33 = ssub.s32 %s20, %s32
      %s34 = ssub.s32 %s21, %s28
      %s35 = sor.u32 %s33, %s34
      %p36 = scmp.eq.s32.totalorder %s35, 0
      %s38 = sadd.s32 %s37, 1
      %s39 = scalar_select %p36, %s37, %s38
      %p42 = pneg %p36
      %p43 = scmp.eq.s32.totalorder %s13, 7
      %p44 = por %p42, %p43
      %p45 = scmp.ne.s32.totalorder %s37, %s40
      %p46 = scmp.eq.s32.totalorder %s13, 0
      %p47 = por %p45, %p46
      %p48 = scmp.ne.s32.totalorder %s37, %s40
      %p49 = scmp.eq.s32.totalorder %s18, 7
      %p50 = por %p48, %p49
      %p51 = scmp.ne.s32.totalorder %s40, %s41
      %p52 = scmp.eq.s32.totalorder %s18, 0
      %p53 = por %p51, %p52
      %p54 = scmp.ne.s32.totalorder %s40, %s41
      %p55 = scmp.eq.s32.totalorder %s19, 7
      %p56 = por %p54, %p55
      %p58 = scmp.ne.s32.totalorder %s41, %s57
      %p59 = scmp.eq.s32.totalorder %s19, 0
      %p60 = por %p58, %p59
      %s61 = ssub.s32 %s21, %s28
      %p62 = scmp.eq.s32.totalorder %s61, 0
      %s64 = sadd.s32 %s63, 1
      %s65 = scalar_select %p62, %s63, %s64
      %p68 = pneg %p62
      %p69 = scmp.eq.s32.totalorder %s13, 7
      %p70 = por %p68, %p69
      %p71 = scmp.ne.s32.totalorder %s63, %s66
      %p72 = scmp.eq.s32.totalorder %s13, 0
      %p73 = por %p71, %p72
      %p74 = scmp.ne.s32.totalorder %s63, %s66
      %p75 = scmp.eq.s32.totalorder %s18, 7
      %p76 = por %p74, %p75
      %p77 = scmp.ne.s32.totalorder %s66, %s67
      %p78 = scmp.eq.s32.totalorder %s18, 0
      %p79 = por %p77, %p78
      %p80 = scmp.ne.s32.totalorder %s66, %s67
      %p81 = scmp.eq.s32.totalorder %s19, 7
      %p82 = por %p80, %p81
      %p84 = scmp.ne.s32.totalorder %s67, %s83
      %p85 = scmp.eq.s32.totalorder %s19, 0
      %p86 = por %p84, %p85
      %s87 = ssub.s32 %s21, %s28
      %p88 = scmp.eq.s32.totalorder %s87, 0
      %s90 = sadd.s32 %s89, 1
      %s91 = scalar_select %p88, %s89, %s90
      %p94 = pneg %p88
      %p95 = scmp.eq.s32.totalorder %s13, 7
      %p96 = por %p94, %p95
      %p97 = scmp.ne.s32.totalorder %s89, %s92
      %p98 = scmp.eq.s32.totalorder %s13, 0
      %p99 = por %p97, %p98
      %p100 = scmp.ne.s32.totalorder %s89, %s92
      %p101 = scmp.eq.s32.totalorder %s18, 7
      %p102 = por %p100, %p101
      %p103 = scmp.ne.s32.totalorder %s92, %s93
      %p104 = scmp.eq.s32.totalorder %s18, 0
      %p105 = por %p103, %p104
      %p106 = scmp.ne.s32.totalorder %s92, %s93
      %p107 = scmp.eq.s32.totalorder %s19, 7
      %p108 = por %p106, %p107
      %p110 = scmp.ne.s32.totalorder %s93, %s109
      %p111 = scmp.eq.s32.totalorder %s19, 0
      %p112 = por %p110, %p111
      %s113 = ssub.s32 %s20, %s32
      %p114 = scmp.eq.s32.totalorder %s113, 0
      %s116 = sadd.s32 %s115, 1
      %s117 = scalar_select %p114, %s115, %s116
      %p120 = pneg %p114
      %p121 = scmp.eq.s32.totalorder %s13, 7
      %p122 = por %p120, %p121
      %p123 = scmp.ne.s32.totalorder %s115, %s118
      %p124 = scmp.eq.s32.totalorder %s13, 0
      %p125 = por %p123, %p124
      %p126 = scmp.ne.s32.totalorder %s115, %s118
      %p127 = scmp.eq.s32.totalorder %s18, 7
      %p128 = por %p126, %p127
      %p129 = scmp.ne.s32.totalorder %s118, %s119
      %p130 = scmp.eq.s32.totalorder %s18, 0
      %p131 = por %p129, %p130
      %p132 = scmp.ne.s32.totalorder %s118, %s119
      %p133 = scmp.eq.s32.totalorder %s19, 7
      %p134 = por %p132, %p133
      %p136 = scmp.ne.s32.totalorder %s119, %s135
      %p137 = scmp.eq.s32.totalorder %s19, 0
      %p138 = por %p136, %p137
      %s139 = ssub.s32 %s20, %s32
      %p140 = scmp.eq.s32.totalorder %s139, 0
      %s142 = sadd.s32 %s141, 1
      %s143 = scalar_select %p140, %s141, %s142
      %p146 = pneg %p140
      %p147 = scmp.eq.s32.totalorder %s13, 7
      %p148 = por %p146, %p147
      %p149 = scmp.ne.s32.totalorder %s141, %s144
      %p150 = scmp.eq.s32.totalorder %s13, 0
      %p151 = por %p149, %p150
      %p152 = scmp.ne.s32.totalorder %s141, %s144
      %p153 = scmp.eq.s32.totalorder %s18, 7
      %p154 = por %p152, %p153
      %p155 = scmp.ne.s32.totalorder %s144, %s145
      %p156 = scmp.eq.s32.totalorder %s18, 0
      %p157 = por %p155, %p156
      %p158 = scmp.ne.s32.totalorder %s144, %s145
      %p159 = scmp.eq.s32.totalorder %s19, 7
      %p160 = por %p158, %p159
      %p162 = scmp.ne.s32.totalorder %s145, %s161
      %p163 = scmp.eq.s32.totalorder %s19, 0
      %p164 = por %p162, %p163
      %s166 = sadd.s32 %s165, 1
      %p169 = scmp.eq.s32.totalorder %s13, 7
      %p170 = scmp.ne.s32.totalorder %s165, %s167
      %p171 = scmp.eq.s32.totalorder %s13, 0
      %p172 = por %p170, %p171
      %p173 = scmp.ne.s32.totalorder %s165, %s167
      %p174 = scmp.eq.s32.totalorder %s18, 7
      %p175 = por %p173, %p174
      %p176 = scmp.ne.s32.totalorder %s167, %s168
      %p177 = scmp.eq.s32.totalorder %s18, 0
      %p178 = por %p176, %p177
      %p179 = scmp.ne.s32.totalorder %s167, %s168
      %p180 = scmp.eq.s32.totalorder %s19, 7
      %p181 = por %p179, %p180
      %p183 = scmp.ne.s32.totalorder %s168, %s182
      %p184 = scmp.eq.s32.totalorder %s19, 0
      %p185 = por %p183, %p184
      %s187 = sadd.s32 %s186, 1
      %p190 = scmp.eq.s32.totalorder %s13, 7
      %p191 = scmp.ne.s32.totalorder %s186, %s188
      %p192 = scmp.eq.s32.totalorder %s13, 0
      %p193 = por %p191, %p192
      %p194 = scmp.ne.s32.totalorder %s186, %s188
      %p195 = scmp.eq.s32.totalorder %s18, 7
      %p196 = por %p194, %p195
      %p197 = scmp.ne.s32.totalorder %s188, %s189
      %p198 = scmp.eq.s32.totalorder %s18, 0
      %p199 = por %p197, %p198
      %p200 = scmp.ne.s32.totalorder %s188, %s189
      %p201 = scmp.eq.s32.totalorder %s19, 7
      %p202 = por %p200, %p201
      %p204 = scmp.ne.s32.totalorder %s189, %s203
      %p205 = scmp.eq.s32.totalorder %s19, 0
      %p206 = por %p204, %p205
      %s207 = ssub.s32 %s20, %s32
      %p208 = scmp.eq.s32.totalorder %s207, 0
      %s210 = sadd.s32 %s209, 1
      %s211 = scalar_select %p208, %s209, %s210
      %p214 = pneg %p208
      %p215 = scmp.eq.s32.totalorder %s13, 7
      %p216 = por %p214, %p215
      %p217 = scmp.ne.s32.totalorder %s209, %s212
      %p218 = scmp.eq.s32.totalorder %s13, 0
      %p219 = por %p217, %p218
      %p220 = scmp.ne.s32.totalorder %s209, %s212
      %p221 = scmp.eq.s32.totalorder %s18, 7
      %p222 = por %p220, %p221
      %p223 = scmp.ne.s32.totalorder %s212, %s213
      %p224 = scmp.eq.s32.totalorder %s18, 0
      %p225 = por %p223, %p224
      %p226 = scmp.ne.s32.totalorder %s212, %s213
      %p227 = scmp.eq.s32.totalorder %s19, 7
      %p228 = por %p226, %p227
      %p230 = scmp.ne.s32.totalorder %s213, %s229
      %p231 = scmp.eq.s32.totalorder %s19, 0
      %p232 = por %p230, %p231
      %p233 = scmp.le.s32.totalorder 1, %s13
      %p234 = scmp.lt.s32.totalorder %s13, 9
      %p235 = pnand %p233, %p234
      %p236 = pneg %p235
      // Predicated region
      $region9: #{hl_layer_forward.1} parent=5 // pred_check
        _
      $region10: #{hl_layer_forward.1} parent=5 // pred_check_branch
        %238 = sbr.rel (%p235) target = $region12
      $region11: #{hl_layer_forward.1} parent=5 // pred_region
        %s239 = ssub.s32 %s13, 1
        // Predicated region
        $region13: #{hl_layer_forward.1} parent=11 // pred_check
          %p240 = pneg %p178
        $region14: #{hl_layer_forward.1} parent=11 // pred_check_branch
          %242 = sbr.rel (%p240) target = $region16
        $region15: #{hl_layer_forward.1} parent=11 // pred_region
          _
        $region16: #{hl_layer_forward.1} parent=11 // pred_fallthru
          _
        // Predicated region
        $region17: #{hl_layer_forward.1} parent=11 // pred_check
          %p243 = pneg %p199
        $region18: #{hl_layer_forward.1} parent=11 // pred_check_branch
          %245 = sbr.rel (%p243) target = $region20
        $region19: #{hl_layer_forward.1} parent=11 // pred_region
          _
        $region20: #{hl_layer_forward.1} parent=11 // pred_fallthru
          _
      $region12: #{hl_layer_forward.1} parent=5 // pred_fallthru
        _
      %p246 = scmp.lt.s32.totalorder %s13, 8
      // Predicated region
      $region21: #{hl_layer_forward.1} parent=5 // pred_check
        %p247 = pneg %p246
      $region22: #{hl_layer_forward.1} parent=5 // pred_check_branch
        %249 = sbr.rel (%p247) target = $region24
      $region23: #{hl_layer_forward.1} parent=5 // pred_region
        // Predicated region
        $region25: #{hl_layer_forward.1} parent=23 // pred_check
          %p250 = pneg %p47
        $region26: #{hl_layer_forward.1} parent=23 // pred_check_branch
          %252 = sbr.rel (%p250) target = $region28
        $region27: #{hl_layer_forward.1} parent=23 // pred_region
          %s253 = sand.u32 %s37, 1
          %s254 = sand.u32 %s37, 1
          %s255 = smul.addr %s254, 16
          %s256 = scalar_lea.vmem [#allocation3], %s255
          %s257 = smul.u32 2, %s20
          %s258 = smul.addr %s257, 2
          %s259 = sadd.s32 %s21, %s258
          %s260 = smul.addr %s259, 8
          %s261 = scalar_lea.vmem %s0, %s260
          // Predicated region
          $region29: #{hl_layer_forward.1} parent=27 // pred_check
            _
          $region30: #{hl_layer_forward.1} parent=27 // pred_check_branch
            %263 = sbr.rel (0) target = $region32
          $region31: #{hl_layer_forward.1} parent=27 // pred_region
            // Predicated region
            $region33: #{hl_layer_forward.1} parent=31 // pred_check
              _
            $region34: #{hl_layer_forward.1} parent=31 // pred_check_branch
              %265 = sbr.rel (0) target = $region36
            $region35: #{hl_layer_forward.1} parent=31 // pred_region
              // Predicated region
              $region48: #{hl_layer_forward.1} parent=35 // pred_check
                _
              $region49: #{hl_layer_forward.1} parent=35 // pred_check_branch
                %283 = sbr.rel (0) target = $region51
              $region50: #{hl_layer_forward.1} parent=35 // pred_region
                loop: start=0, step=1, limit=1
                $region52: #{hl_layer_forward.1} parent=50 // loop_pre_header
                  _
                $region53: #{hl_layer_forward.1} parent=50 // loop_header
                  %s285 = sphi 0, %s289
                  %p286 = scmp.ge.s32.totalorder %s285, 1
                  %s290 = sphi %s261, %s261
                  %s291 = sphi %s256, %s256
                $region54: #{hl_layer_forward.1} parent=50 // loop_header_branch
                  %288 = sbr.rel (%p286) target = $region58
                $region55: #{hl_layer_forward.1} parent=50 // loop_body
                  %v292 = vld [vmem:[%s290] sm:$0xff]
                  %293 = vst [vmem:[%s291] sm:$0xff] %v292
                  %v294 = vld [vmem:[%s290 + $0x10] sm:$0xff]
                  %295 = vst [vmem:[%s291 + $0x8] sm:$0xff] %v294
                $region56: #{hl_layer_forward.1} parent=50 // loop_footer
                  %s289 = sadd.s32 1, %s285
                $region57: #{hl_layer_forward.1} parent=50 // loop_footer_branch
                  %284 = sbr.rel target = $region53
                $region58: #{hl_layer_forward.1} parent=50 // loop_exit
                  _
              $region51: #{hl_layer_forward.1} parent=35 // pred_fallthru
                _
              // Predicated region
              $region59: #{hl_layer_forward.1} parent=35 // pred_check
                _
              $region60: #{hl_layer_forward.1} parent=35 // pred_check_branch
                %297 = sbr.rel target = $region62
              $region61: #{hl_layer_forward.1} parent=35 // pred_region
                _
              $region62: #{hl_layer_forward.1} parent=35 // pred_fallthru
                _
            $region36: #{hl_layer_forward.1} parent=31 // pred_fallthru
              _
            // Predicated region
            $region37: #{hl_layer_forward.1} parent=31 // pred_check
              _
            $region38: #{hl_layer_forward.1} parent=31 // pred_check_branch
              %267 = sbr.rel target = $region40
            $region39: #{hl_layer_forward.1} parent=31 // pred_region
              %s269 = ssub.s32 256, 1
              loop: start=0, step=1, limit=1
              $region41: #{hl_layer_forward.1} parent=39 // loop_pre_header
                _
              $region42: #{hl_layer_forward.1} parent=39 // loop_header
                %s271 = sphi 0, %s275
                %p272 = scmp.ge.s32.totalorder %s271, 1
                %s276 = sphi %s261, %s261
                %s277 = sphi %s256, %s256
              $region43: #{hl_layer_forward.1} parent=39 // loop_header_branch
                %274 = sbr.rel (%p272) target = $region47
              $region44: #{hl_layer_forward.1} parent=39 // loop_body
                %v278 = vld [vmem:[%s276] sm:%s269]
                %279 = vst [vmem:[%s277] sm:%s269] %v278
                %v280 = vld [vmem:[%s276 + $0x10] sm:%s269]
                %281 = vst [vmem:[%s277 + $0x8] sm:%s269] %v280
              $region45: #{hl_layer_forward.1} parent=39 // loop_footer
                %s275 = sadd.s32 1, %s271
              $region46: #{hl_layer_forward.1} parent=39 // loop_footer_branch
                %270 = sbr.rel target = $region42
              $region47: #{hl_layer_forward.1} parent=39 // loop_exit
                _
            $region40: #{hl_layer_forward.1} parent=31 // pred_fallthru
              _
          $region32: #{hl_layer_forward.1} parent=27 // pred_fallthru
            _
          %298 = vnop
        $region28: #{hl_layer_forward.1} parent=23 // pred_fallthru
          _
        // Predicated region
        $region63: #{hl_layer_forward.1} parent=23 // pred_check
          %p299 = pneg %p73
        $region64: #{hl_layer_forward.1} parent=23 // pred_check_branch
          %301 = sbr.rel (%p299) target = $region66
        $region65: #{hl_layer_forward.1} parent=23 // pred_region
          %s302 = sand.u32 %s63, 1
          %s303 = sand.u32 %s63, 1
          %s304 = smul.addr %s303, 256
          %s305 = scalar_lea.vmem [#allocation4], %s304
          %s306 = smul.u32 16, %s21
          %s307 = smul.addr %s306, 8
          %s308 = scalar_lea.vmem %s1, %s307
          // Predicated region
          $region67: #{hl_layer_forward.1} parent=65 // pred_check
            _
          $region68: #{hl_layer_forward.1} parent=65 // pred_check_branch
            %310 = sbr.rel (0) target = $region70
          $region69: #{hl_layer_forward.1} parent=65 // pred_region
            // Predicated region
            $region71: #{hl_layer_forward.1} parent=69 // pred_check
              _
            $region72: #{hl_layer_forward.1} parent=69 // pred_check_branch
              %312 = sbr.rel (0) target = $region74
            $region73: #{hl_layer_forward.1} parent=69 // pred_region
              // Predicated region
              $region86: #{hl_layer_forward.1} parent=73 // pred_check
                _
              $region87: #{hl_layer_forward.1} parent=73 // pred_check_branch
                %390 = sbr.rel (0) target = $region89
              $region88: #{hl_layer_forward.1} parent=73 // pred_region
                loop: start=0, step=1, limit=1
                $region90: #{hl_layer_forward.1} parent=88 // loop_pre_header
                  _
                $region91: #{hl_layer_forward.1} parent=88 // loop_header
                  %s392 = sphi 0, %s396
                  %p393 = scmp.ge.s32.totalorder %s392, 1
                  %s397 = sphi %s308, %s308
                  %s398 = sphi %s305, %s305
                $region92: #{hl_layer_forward.1} parent=88 // loop_header_branch
                  %395 = sbr.rel (%p393) target = $region96
                $region93: #{hl_layer_forward.1} parent=88 // loop_body
                  %v399 = vld [vmem:[%s397] sm:$0xff]
                  %400 = vst [vmem:[%s398] sm:$0xff] %v399
                  %v401 = vld [vmem:[%s397 + $0x8] sm:$0xff]
                  %402 = vst [vmem:[%s398 + $0x8] sm:$0xff] %v401
                  %v403 = vld [vmem:[%s397 + $0x10] sm:$0xff]
                  %404 = vst [vmem:[%s398 + $0x10] sm:$0xff] %v403
                  %v405 = vld [vmem:[%s397 + $0x18] sm:$0xff]
                  %406 = vst [vmem:[%s398 + $0x18] sm:$0xff] %v405
                  %v407 = vld [vmem:[%s397 + $0x20] sm:$0xff]
                  %408 = vst [vmem:[%s398 + $0x20] sm:$0xff] %v407
                  %v409 = vld [vmem:[%s397 + $0x28] sm:$0xff]
                  %410 = vst [vmem:[%s398 + $0x28] sm:$0xff] %v409
                  %v411 = vld [vmem:[%s397 + $0x30] sm:$0xff]
                  %412 = vst [vmem:[%s398 + $0x30] sm:$0xff] %v411
                  %v413 = vld [vmem:[%s397 + $0x38] sm:$0xff]
                  %414 = vst [vmem:[%s398 + $0x38] sm:$0xff] %v413
                  %v415 = vld [vmem:[%s397 + $0x40] sm:$0xff]
                  %416 = vst [vmem:[%s398 + $0x40] sm:$0xff] %v415
                  %v417 = vld [vmem:[%s397 + $0x48] sm:$0xff]
                  %418 = vst [vmem:[%s398 + $0x48] sm:$0xff] %v417
                  %v419 = vld [vmem:[%s397 + $0x50] sm:$0xff]
                  %420 = vst [vmem:[%s398 + $0x50] sm:$0xff] %v419
                  %v421 = vld [vmem:[%s397 + $0x58] sm:$0xff]
                  %422 = vst [vmem:[%s398 + $0x58] sm:$0xff] %v421
                  %v423 = vld [vmem:[%s397 + $0x60] sm:$0xff]
                  %424 = vst [vmem:[%s398 + $0x60] sm:$0xff] %v423
                  %v425 = vld [vmem:[%s397 + $0x68] sm:$0xff]
                  %426 = vst [vmem:[%s398 + $0x68] sm:$0xff] %v425
                  %v427 = vld [vmem:[%s397 + $0x70] sm:$0xff]
                  %428 = vst [vmem:[%s398 + $0x70] sm:$0xff] %v427
                  %v429 = vld [vmem:[%s397 + $0x78] sm:$0xff]
                  %430 = vst [vmem:[%s398 + $0x78] sm:$0xff] %v429
                  %v431 = vld [vmem:[%s397 + $0x100] sm:$0xff]
                  %432 = vst [vmem:[%s398 + $0x80] sm:$0xff] %v431
                  %v433 = vld [vmem:[%s397 + $0x108] sm:$0xff]
                  %434 = vst [vmem:[%s398 + $0x88] sm:$0xff] %v433
                  %v435 = vld [vmem:[%s397 + $0x110] sm:$0xff]
                  %436 = vst [vmem:[%s398 + $0x90] sm:$0xff] %v435
                  %v437 = vld [vmem:[%s397 + $0x118] sm:$0xff]
                  %438 = vst [vmem:[%s398 + $0x98] sm:$0xff] %v437
                  %v439 = vld [vmem:[%s397 + $0x120] sm:$0xff]
                  %440 = vst [vmem:[%s398 + $0xa0] sm:$0xff] %v439
                  %v441 = vld [vmem:[%s397 + $0x128] sm:$0xff]
                  %442 = vst [vmem:[%s398 + $0xa8] sm:$0xff] %v441
                  %v443 = vld [vmem:[%s397 + $0x130] sm:$0xff]
                  %444 = vst [vmem:[%s398 + $0xb0] sm:$0xff] %v443
                  %v445 = vld [vmem:[%s397 + $0x138] sm:$0xff]
                  %446 = vst [vmem:[%s398 + $0xb8] sm:$0xff] %v445
                  %v447 = vld [vmem:[%s397 + $0x140] sm:$0xff]
                  %448 = vst [vmem:[%s398 + $0xc0] sm:$0xff] %v447
                  %v449 = vld [vmem:[%s397 + $0x148] sm:$0xff]
                  %450 = vst [vmem:[%s398 + $0xc8] sm:$0xff] %v449
                  %v451 = vld [vmem:[%s397 + $0x150] sm:$0xff]
                  %452 = vst [vmem:[%s398 + $0xd0] sm:$0xff] %v451
                  %v453 = vld [vmem:[%s397 + $0x158] sm:$0xff]
                  %454 = vst [vmem:[%s398 + $0xd8] sm:$0xff] %v453
                  %v455 = vld [vmem:[%s397 + $0x160] sm:$0xff]
                  %456 = vst [vmem:[%s398 + $0xe0] sm:$0xff] %v455
                  %v457 = vld [vmem:[%s397 + $0x168] sm:$0xff]
                  %458 = vst [vmem:[%s398 + $0xe8] sm:$0xff] %v457
                  %v459 = vld [vmem:[%s397 + $0x170] sm:$0xff]
                  %460 = vst [vmem:[%s398 + $0xf0] sm:$0xff] %v459
                  %v461 = vld [vmem:[%s397 + $0x178] sm:$0xff]
                  %462 = vst [vmem:[%s398 + $0xf8] sm:$0xff] %v461
                $region94: #{hl_layer_forward.1} parent=88 // loop_footer
                  %s396 = sadd.s32 1, %s392
                $region95: #{hl_layer_forward.1} parent=88 // loop_footer_branch
                  %391 = sbr.rel target = $region91
                $region96: #{hl_layer_forward.1} parent=88 // loop_exit
                  _
              $region89: #{hl_layer_forward.1} parent=73 // pred_fallthru
                _
              // Predicated region
              $region97: #{hl_layer_forward.1} parent=73 // pred_check
                _
              $region98: #{hl_layer_forward.1} parent=73 // pred_check_branch
                %464 = sbr.rel target = $region100
              $region99: #{hl_layer_forward.1} parent=73 // pred_region
                _
              $region100: #{hl_layer_forward.1} parent=73 // pred_fallthru
                _
            $region74: #{hl_layer_forward.1} parent=69 // pred_fallthru
              _
            // Predicated region
            $region75: #{hl_layer_forward.1} parent=69 // pred_check
              _
            $region76: #{hl_layer_forward.1} parent=69 // pred_check_branch
              %314 = sbr.rel target = $region78
            $region77: #{hl_layer_forward.1} parent=69 // pred_region
              %s316 = ssub.s32 256, 1
              loop: start=0, step=1, limit=1
              $region79: #{hl_layer_forward.1} parent=77 // loop_pre_header
                _
              $region80: #{hl_layer_forward.1} parent=77 // loop_header
                %s318 = sphi 0, %s322
                %p319 = scmp.ge.s32.totalorder %s318, 1
                %s323 = sphi %s308, %s308
                %s324 = sphi %s305, %s305
              $region81: #{hl_layer_forward.1} parent=77 // loop_header_branch
                %321 = sbr.rel (%p319) target = $region85
              $region82: #{hl_layer_forward.1} parent=77 // loop_body
                %v325 = vld [vmem:[%s323] sm:%s316]
                %326 = vst [vmem:[%s324] sm:%s316] %v325
                %v327 = vld [vmem:[%s323 + $0x8] sm:%s316]
                %328 = vst [vmem:[%s324 + $0x8] sm:%s316] %v327
                %v329 = vld [vmem:[%s323 + $0x10] sm:%s316]
                %330 = vst [vmem:[%s324 + $0x10] sm:%s316] %v329
                %v331 = vld [vmem:[%s323 + $0x18] sm:%s316]
                %332 = vst [vmem:[%s324 + $0x18] sm:%s316] %v331
                %v333 = vld [vmem:[%s323 + $0x20] sm:%s316]
                %334 = vst [vmem:[%s324 + $0x20] sm:%s316] %v333
                %v335 = vld [vmem:[%s323 + $0x28] sm:%s316]
                %336 = vst [vmem:[%s324 + $0x28] sm:%s316] %v335
                %v337 = vld [vmem:[%s323 + $0x30] sm:%s316]
                %338 = vst [vmem:[%s324 + $0x30] sm:%s316] %v337
                %v339 = vld [vmem:[%s323 + $0x38] sm:%s316]
                %340 = vst [vmem:[%s324 + $0x38] sm:%s316] %v339
                %v341 = vld [vmem:[%s323 + $0x40] sm:%s316]
                %342 = vst [vmem:[%s324 + $0x40] sm:%s316] %v341
                %v343 = vld [vmem:[%s323 + $0x48] sm:%s316]
                %344 = vst [vmem:[%s324 + $0x48] sm:%s316] %v343
                %v345 = vld [vmem:[%s323 + $0x50] sm:%s316]
                %346 = vst [vmem:[%s324 + $0x50] sm:%s316] %v345
                %v347 = vld [vmem:[%s323 + $0x58] sm:%s316]
                %348 = vst [vmem:[%s324 + $0x58] sm:%s316] %v347
                %v349 = vld [vmem:[%s323 + $0x60] sm:%s316]
                %350 = vst [vmem:[%s324 + $0x60] sm:%s316] %v349
                %v351 = vld [vmem:[%s323 + $0x68] sm:%s316]
                %352 = vst [vmem:[%s324 + $0x68] sm:%s316] %v351
                %v353 = vld [vmem:[%s323 + $0x70] sm:%s316]
                %354 = vst [vmem:[%s324 + $0x70] sm:%s316] %v353
                %v355 = vld [vmem:[%s323 + $0x78] sm:%s316]
                %356 = vst [vmem:[%s324 + $0x78] sm:%s316] %v355
                %v357 = vld [vmem:[%s323 + $0x100] sm:%s316]
                %358 = vst [vmem:[%s324 + $0x80] sm:%s316] %v357
                %v359 = vld [vmem:[%s323 + $0x108] sm:%s316]
                %360 = vst [vmem:[%s324 + $0x88] sm:%s316] %v359
                %v361 = vld [vmem:[%s323 + $0x110] sm:%s316]
                %362 = vst [vmem:[%s324 + $0x90] sm:%s316] %v361
                %v363 = vld [vmem:[%s323 + $0x118] sm:%s316]
                %364 = vst [vmem:[%s324 + $0x98] sm:%s316] %v363
                %v365 = vld [vmem:[%s323 + $0x120] sm:%s316]
                %366 = vst [vmem:[%s324 + $0xa0] sm:%s316] %v365
                %v367 = vld [vmem:[%s323 + $0x128] sm:%s316]
                %368 = vst [vmem:[%s324 + $0xa8] sm:%s316] %v367
                %v369 = vld [vmem:[%s323 + $0x130] sm:%s316]
                %370 = vst [vmem:[%s324 + $0xb0] sm:%s316] %v369
                %v371 = vld [vmem:[%s323 + $0x138] sm:%s316]
                %372 = vst [vmem:[%s324 + $0xb8] sm:%s316] %v371
                %v373 = vld [vmem:[%s323 + $0x140] sm:%s316]
                %374 = vst [vmem:[%s324 + $0xc0] sm:%s316] %v373
                %v375 = vld [vmem:[%s323 + $0x148] sm:%s316]
                %376 = vst [vmem:[%s324 + $0xc8] sm:%s316] %v375
                %v377 = vld [vmem:[%s323 + $0x150] sm:%s316]
                %378 = vst [vmem:[%s324 + $0xd0] sm:%s316] %v377
                %v379 = vld [vmem:[%s323 + $0x158] sm:%s316]
                %380 = vst [vmem:[%s324 + $0xd8] sm:%s316] %v379
                %v381 = vld [vmem:[%s323 + $0x160] sm:%s316]
                %382 = vst [vmem:[%s324 + $0xe0] sm:%s316] %v381
                %v383 = vld [vmem:[%s323 + $0x168] sm:%s316]
                %384 = vst [vmem:[%s324 + $0xe8] sm:%s316] %v383
                %v385 = vld [vmem:[%s323 + $0x170] sm:%s316]
                %386 = vst [vmem:[%s324 + $0xf0] sm:%s316] %v385
                %v387 = vld [vmem:[%s323 + $0x178] sm:%s316]
                %388 = vst [vmem:[%s324 + $0xf8] sm:%s316] %v387
              $region83: #{hl_layer_forward.1} parent=77 // loop_footer
                %s322 = sadd.s32 1, %s318
              $region84: #{hl_layer_forward.1} parent=77 // loop_footer_branch
                %317 = sbr.rel target = $region80
              $region85: #{hl_layer_forward.1} parent=77 // loop_exit
                _
            $region78: #{hl_layer_forward.1} parent=69 // pred_fallthru
              _
          $region70: #{hl_layer_forward.1} parent=65 // pred_fallthru
            _
          %465 = vnop
        $region66: #{hl_layer_forward.1} parent=23 // pred_fallthru
          _
        // Predicated region
        $region101: #{hl_layer_forward.1} parent=23 // pred_check
          %p466 = pneg %p99
        $region102: #{hl_layer_forward.1} parent=23 // pred_check_branch
          %468 = sbr.rel (%p466) target = $region104
        $region103: #{hl_layer_forward.1} parent=23 // pred_region
          %s469 = sand.u32 %s89, 1
          %s470 = sand.u32 %s89, 1
          %s471 = smul.addr %s470, 2
          %s472 = scalar_lea.vmem [#allocation5], %s471
          %s473 = scalar_lea.vmem %s2, %s21
          // Predicated region
          $region105: #{hl_layer_forward.1} parent=103 // pred_check
            _
          $region106: #{hl_layer_forward.1} parent=103 // pred_check_branch
            %475 = sbr.rel (0) target = $region108
          $region107: #{hl_layer_forward.1} parent=103 // pred_region
            // Predicated region
            $region109: #{hl_layer_forward.1} parent=107 // pred_check
              _
            $region110: #{hl_layer_forward.1} parent=107 // pred_check_branch
              %477 = sbr.rel target = $region112
            $region111: #{hl_layer_forward.1} parent=107 // pred_region
              // Predicated region
              $region124: #{hl_layer_forward.1} parent=111 // pred_check
                _
              $region125: #{hl_layer_forward.1} parent=111 // pred_check_branch
                %495 = sbr.rel (0) target = $region127
              $region126: #{hl_layer_forward.1} parent=111 // pred_region
                %s497 = ssub.s32 2, 1
                loop: start=0, step=1, limit=1
                $region128: #{hl_layer_forward.1} parent=126 // loop_pre_header
                  _
                $region129: #{hl_layer_forward.1} parent=126 // loop_header
                  %s499 = sphi 0, %s503
                  %p500 = scmp.ge.s32.totalorder %s499, 1
                  %s504 = sphi %s473, %s473
                  %s505 = sphi %s472, %s472
                $region130: #{hl_layer_forward.1} parent=126 // loop_header_branch
                  %502 = sbr.rel (%p500) target = $region134
                $region131: #{hl_layer_forward.1} parent=126 // loop_body
                  %v506 = vld [vmem:[%s504] sm:%s497]
                  %507 = vst [vmem:[%s505] sm:%s497] %v506
                  %v508 = vld [vmem:[%s504 + $0x2] sm:%s497]
                  %509 = vst [vmem:[%s505 + $0x1] sm:%s497] %v508
                $region132: #{hl_layer_forward.1} parent=126 // loop_footer
                  %s503 = sadd.s32 1, %s499
                $region133: #{hl_layer_forward.1} parent=126 // loop_footer_branch
                  %498 = sbr.rel target = $region129
                $region134: #{hl_layer_forward.1} parent=126 // loop_exit
                  _
              $region127: #{hl_layer_forward.1} parent=111 // pred_fallthru
                _
            $region112: #{hl_layer_forward.1} parent=107 // pred_fallthru
              _
            // Predicated region
            $region113: #{hl_layer_forward.1} parent=107 // pred_check
              _
            $region114: #{hl_layer_forward.1} parent=107 // pred_check_branch
              %479 = sbr.rel (0) target = $region116
            $region115: #{hl_layer_forward.1} parent=107 // pred_region
              %s481 = ssub.s32 2, 1
              loop: start=0, step=1, limit=1
              $region117: #{hl_layer_forward.1} parent=115 // loop_pre_header
                _
              $region118: #{hl_layer_forward.1} parent=115 // loop_header
                %s483 = sphi 0, %s487
                %p484 = scmp.ge.s32.totalorder %s483, 1
                %s488 = sphi %s473, %s473
                %s489 = sphi %s472, %s472
              $region119: #{hl_layer_forward.1} parent=115 // loop_header_branch
                %486 = sbr.rel (%p484) target = $region123
              $region120: #{hl_layer_forward.1} parent=115 // loop_body
                %v490 = vld [vmem:[%s488] sm:%s481]
                %491 = vst [vmem:[%s489] sm:%s481] %v490
                %v492 = vld [vmem:[%s488 + $0x2] sm:%s481]
                %493 = vst [vmem:[%s489 + $0x1] sm:%s481] %v492
              $region121: #{hl_layer_forward.1} parent=115 // loop_footer
                %s487 = sadd.s32 1, %s483
              $region122: #{hl_layer_forward.1} parent=115 // loop_footer_branch
                %482 = sbr.rel target = $region118
              $region123: #{hl_layer_forward.1} parent=115 // loop_exit
                _
            $region116: #{hl_layer_forward.1} parent=107 // pred_fallthru
              _
          $region108: #{hl_layer_forward.1} parent=103 // pred_fallthru
            _
          %510 = vnop
        $region104: #{hl_layer_forward.1} parent=23 // pred_fallthru
          _
        // Predicated region
        $region135: #{hl_layer_forward.1} parent=23 // pred_check
          %p511 = pneg %p125
        $region136: #{hl_layer_forward.1} parent=23 // pred_check_branch
          %513 = sbr.rel (%p511) target = $region138
        $region137: #{hl_layer_forward.1} parent=23 // pred_region
          %s514 = sand.u32 %s115, 1
          %s515 = sand.u32 %s115, 1
          %s516 = smul.addr %s515, 128
          %s517 = scalar_lea.vmem [#allocation6], %s516
          %s518 = smul.u32 8, %s20
          %s519 = smul.addr %s518, 8
          %s520 = scalar_lea.vmem %s3, %s519
          // Predicated region
          $region139: #{hl_layer_forward.1} parent=137 // pred_check
            _
          $region140: #{hl_layer_forward.1} parent=137 // pred_check_branch
            %522 = sbr.rel (0) target = $region142
          $region141: #{hl_layer_forward.1} parent=137 // pred_region
            // Predicated region
            $region143: #{hl_layer_forward.1} parent=141 // pred_check
              _
            $region144: #{hl_layer_forward.1} parent=141 // pred_check_branch
              %524 = sbr.rel (0) target = $region146
            $region145: #{hl_layer_forward.1} parent=141 // pred_region
              // Predicated region
              $region158: #{hl_layer_forward.1} parent=145 // pred_check
                _
              $region159: #{hl_layer_forward.1} parent=145 // pred_check_branch
                %570 = sbr.rel (0) target = $region161
              $region160: #{hl_layer_forward.1} parent=145 // pred_region
                loop: start=0, step=1, limit=1
                $region162: #{hl_layer_forward.1} parent=160 // loop_pre_header
                  _
                $region163: #{hl_layer_forward.1} parent=160 // loop_header
                  %s572 = sphi 0, %s576
                  %p573 = scmp.ge.s32.totalorder %s572, 1
                  %s577 = sphi %s520, %s520
                  %s578 = sphi %s517, %s517
                $region164: #{hl_layer_forward.1} parent=160 // loop_header_branch
                  %575 = sbr.rel (%p573) target = $region168
                $region165: #{hl_layer_forward.1} parent=160 // loop_body
                  %v579 = vld [vmem:[%s577] sm:$0xff]
                  %580 = vst [vmem:[%s578] sm:$0xff] %v579
                  %v581 = vld [vmem:[%s577 + $0x8] sm:$0xff]
                  %582 = vst [vmem:[%s578 + $0x8] sm:$0xff] %v581
                  %v583 = vld [vmem:[%s577 + $0x10] sm:$0xff]
                  %584 = vst [vmem:[%s578 + $0x10] sm:$0xff] %v583
                  %v585 = vld [vmem:[%s577 + $0x18] sm:$0xff]
                  %586 = vst [vmem:[%s578 + $0x18] sm:$0xff] %v585
                  %v587 = vld [vmem:[%s577 + $0x20] sm:$0xff]
                  %588 = vst [vmem:[%s578 + $0x20] sm:$0xff] %v587
                  %v589 = vld [vmem:[%s577 + $0x28] sm:$0xff]
                  %590 = vst [vmem:[%s578 + $0x28] sm:$0xff] %v589
                  %v591 = vld [vmem:[%s577 + $0x30] sm:$0xff]
                  %592 = vst [vmem:[%s578 + $0x30] sm:$0xff] %v591
                  %v593 = vld [vmem:[%s577 + $0x38] sm:$0xff]
                  %594 = vst [vmem:[%s578 + $0x38] sm:$0xff] %v593
                  %v595 = vld [vmem:[%s577 + $0x100] sm:$0xff]
                  %596 = vst [vmem:[%s578 + $0x40] sm:$0xff] %v595
                  %v597 = vld [vmem:[%s577 + $0x108] sm:$0xff]
                  %598 = vst [vmem:[%s578 + $0x48] sm:$0xff] %v597
                  %v599 = vld [vmem:[%s577 + $0x110] sm:$0xff]
                  %600 = vst [vmem:[%s578 + $0x50] sm:$0xff] %v599
                  %v601 = vld [vmem:[%s577 + $0x118] sm:$0xff]
                  %602 = vst [vmem:[%s578 + $0x58] sm:$0xff] %v601
                  %v603 = vld [vmem:[%s577 + $0x120] sm:$0xff]
                  %604 = vst [vmem:[%s578 + $0x60] sm:$0xff] %v603
                  %v605 = vld [vmem:[%s577 + $0x128] sm:$0xff]
                  %606 = vst [vmem:[%s578 + $0x68] sm:$0xff] %v605
                  %v607 = vld [vmem:[%s577 + $0x130] sm:$0xff]
                  %608 = vst [vmem:[%s578 + $0x70] sm:$0xff] %v607
                  %v609 = vld [vmem:[%s577 + $0x138] sm:$0xff]
                  %610 = vst [vmem:[%s578 + $0x78] sm:$0xff] %v609
                $region166: #{hl_layer_forward.1} parent=160 // loop_footer
                  %s576 = sadd.s32 1, %s572
                $region167: #{hl_layer_forward.1} parent=160 // loop_footer_branch
                  %571 = sbr.rel target = $region163
                $region168: #{hl_layer_forward.1} parent=160 // loop_exit
                  _
              $region161: #{hl_layer_forward.1} parent=145 // pred_fallthru
                _
              // Predicated region
              $region169: #{hl_layer_forward.1} parent=145 // pred_check
                _
              $region170: #{hl_layer_forward.1} parent=145 // pred_check_branch
                %612 = sbr.rel target = $region172
              $region171: #{hl_layer_forward.1} parent=145 // pred_region
                _
              $region172: #{hl_layer_forward.1} parent=145 // pred_fallthru
                _
            $region146: #{hl_layer_forward.1} parent=141 // pred_fallthru
              _
            // Predicated region
            $region147: #{hl_layer_forward.1} parent=141 // pred_check
              _
            $region148: #{hl_layer_forward.1} parent=141 // pred_check_branch
              %526 = sbr.rel target = $region150
            $region149: #{hl_layer_forward.1} parent=141 // pred_region
              %s528 = ssub.s32 256, 1
              loop: start=0, step=1, limit=1
              $region151: #{hl_layer_forward.1} parent=149 // loop_pre_header
                _
              $region152: #{hl_layer_forward.1} parent=149 // loop_header
                %s530 = sphi 0, %s534
                %p531 = scmp.ge.s32.totalorder %s530, 1
                %s535 = sphi %s520, %s520
                %s536 = sphi %s517, %s517
              $region153: #{hl_layer_forward.1} parent=149 // loop_header_branch
                %533 = sbr.rel (%p531) target = $region157
              $region154: #{hl_layer_forward.1} parent=149 // loop_body
                %v537 = vld [vmem:[%s535] sm:%s528]
                %538 = vst [vmem:[%s536] sm:%s528] %v537
                %v539 = vld [vmem:[%s535 + $0x8] sm:%s528]
                %540 = vst [vmem:[%s536 + $0x8] sm:%s528] %v539
                %v541 = vld [vmem:[%s535 + $0x10] sm:%s528]
                %542 = vst [vmem:[%s536 + $0x10] sm:%s528] %v541
                %v543 = vld [vmem:[%s535 + $0x18] sm:%s528]
                %544 = vst [vmem:[%s536 + $0x18] sm:%s528] %v543
                %v545 = vld [vmem:[%s535 + $0x20] sm:%s528]
                %546 = vst [vmem:[%s536 + $0x20] sm:%s528] %v545
                %v547 = vld [vmem:[%s535 + $0x28] sm:%s528]
                %548 = vst [vmem:[%s536 + $0x28] sm:%s528] %v547
                %v549 = vld [vmem:[%s535 + $0x30] sm:%s528]
                %550 = vst [vmem:[%s536 + $0x30] sm:%s528] %v549
                %v551 = vld [vmem:[%s535 + $0x38] sm:%s528]
                %552 = vst [vmem:[%s536 + $0x38] sm:%s528] %v551
                %v553 = vld [vmem:[%s535 + $0x100] sm:%s528]
                %554 = vst [vmem:[%s536 + $0x40] sm:%s528] %v553
                %v555 = vld [vmem:[%s535 + $0x108] sm:%s528]
                %556 = vst [vmem:[%s536 + $0x48] sm:%s528] %v555
                %v557 = vld [vmem:[%s535 + $0x110] sm:%s528]
                %558 = vst [vmem:[%s536 + $0x50] sm:%s528] %v557
                %v559 = vld [vmem:[%s535 + $0x118] sm:%s528]
                %560 = vst [vmem:[%s536 + $0x58] sm:%s528] %v559
                %v561 = vld [vmem:[%s535 + $0x120] sm:%s528]
                %562 = vst [vmem:[%s536 + $0x60] sm:%s528] %v561
                %v563 = vld [vmem:[%s535 + $0x128] sm:%s528]
                %564 = vst [vmem:[%s536 + $0x68] sm:%s528] %v563
                %v565 = vld [vmem:[%s535 + $0x130] sm:%s528]
                %566 = vst [vmem:[%s536 + $0x70] sm:%s528] %v565
                %v567 = vld [vmem:[%s535 + $0x138] sm:%s528]
                %568 = vst [vmem:[%s536 + $0x78] sm:%s528] %v567
              $region155: #{hl_layer_forward.1} parent=149 // loop_footer
                %s534 = sadd.s32 1, %s530
              $region156: #{hl_layer_forward.1} parent=149 // loop_footer_branch
                %529 = sbr.rel target = $region152
              $region157: #{hl_layer_forward.1} parent=149 // loop_exit
                _
            $region150: #{hl_layer_forward.1} parent=141 // pred_fallthru
              _
          $region142: #{hl_layer_forward.1} parent=137 // pred_fallthru
            _
          %613 = vnop
        $region138: #{hl_layer_forward.1} parent=23 // pred_fallthru
          _
        // Predicated region
        $region173: #{hl_layer_forward.1} parent=23 // pred_check
          %p614 = pneg %p151
        $region174: #{hl_layer_forward.1} parent=23 // pred_check_branch
          %616 = sbr.rel (%p614) target = $region176
        $region175: #{hl_layer_forward.1} parent=23 // pred_region
          %s617 = smul.u32 8, %s20
          %p618 = scmp.lt.s32.totalorder %s617, 31
          %s619 = scalar_select %p618, %s617, 31
          %s620 = smul.addr %s619, 8
          %s621 = scalar_lea.vmem %s4, %s620
          %s622 = smul.u32 8, %s20
        $region176: #{hl_layer_forward.1} parent=23 // pred_fallthru
          _
      $region24: #{hl_layer_forward.1} parent=5 // pred_fallthru
        _
      %p623 = scmp.le.s32.totalorder 1, %s13
      %p624 = scmp.lt.s32.totalorder %s13, 9
      %p625 = pnand %p623, %p624
      %p626 = pneg %p625
      // Predicated region
      $region177: #{hl_layer_forward.1} parent=5 // pred_check
        _
      $region178: #{hl_layer_forward.1} parent=5 // pred_check_branch
        %628 = sbr.rel (%p625) target = $region180
      $region179: #{hl_layer_forward.1} parent=5 // pred_region
        %s629 = ssub.s32 %s13, 1
        %s630 = sand.u32 %s40, 1
        %s631 = sand.u32 %s40, 1
        %s632 = smul.addr %s631, 16
        %s633 = scalar_lea.vmem [#allocation3], %s632
        // Predicated region
        $region181: #{hl_layer_forward.1} parent=179 // pred_check
          %p634 = pneg %p53
        $region182: #{hl_layer_forward.1} parent=179 // pred_check_branch
          %636 = sbr.rel (%p634) target = $region184
        $region183: #{hl_layer_forward.1} parent=179 // pred_region
          _
        $region184: #{hl_layer_forward.1} parent=179 // pred_fallthru
          _
        %s637 = sand.u32 %s66, 1
        %s638 = sand.u32 %s66, 1
        %s639 = smul.addr %s638, 256
        %s640 = scalar_lea.vmem [#allocation4], %s639
        // Predicated region
        $region185: #{hl_layer_forward.1} parent=179 // pred_check
          %p641 = pneg %p79
        $region186: #{hl_layer_forward.1} parent=179 // pred_check_branch
          %643 = sbr.rel (%p641) target = $region188
        $region187: #{hl_layer_forward.1} parent=179 // pred_region
          _
        $region188: #{hl_layer_forward.1} parent=179 // pred_fallthru
          _
        %s644 = sand.u32 %s92, 1
        %s645 = sand.u32 %s92, 1
        %s646 = smul.addr %s645, 2
        %s647 = scalar_lea.vmem [#allocation5], %s646
        // Predicated region
        $region189: #{hl_layer_forward.1} parent=179 // pred_check
          %p648 = pneg %p105
        $region190: #{hl_layer_forward.1} parent=179 // pred_check_branch
          %650 = sbr.rel (%p648) target = $region192
        $region191: #{hl_layer_forward.1} parent=179 // pred_region
          _
        $region192: #{hl_layer_forward.1} parent=179 // pred_fallthru
          _
        %s651 = sand.u32 %s118, 1
        %s652 = sand.u32 %s118, 1
        %s653 = smul.addr %s652, 128
        %s654 = scalar_lea.vmem [#allocation6], %s653
        // Predicated region
        $region193: #{hl_layer_forward.1} parent=179 // pred_check
          %p655 = pneg %p131
        $region194: #{hl_layer_forward.1} parent=179 // pred_check_branch
          %657 = sbr.rel (%p655) target = $region196
        $region195: #{hl_layer_forward.1} parent=179 // pred_region
          _
        $region196: #{hl_layer_forward.1} parent=179 // pred_fallthru
          _
        %s658 = sand.u32 %s40, 1
        %s659 = sand.u32 %s40, 1
        %s660 = smul.addr %s659, 16
        %s661 = scalar_lea.vmem [#allocation3], %s660
        %p662 = pneg %p53
        %p663 = pneg %p50
        %s664 = sand.u32 %s66, 1
        %s665 = sand.u32 %s66, 1
        %s666 = smul.addr %s665, 256
        %s667 = scalar_lea.vmem [#allocation4], %s666
        %p668 = pneg %p79
        %p669 = pneg %p76
        %s670 = sand.u32 %s92, 1
        %s671 = sand.u32 %s92, 1
        %s672 = smul.addr %s671, 2
        %s673 = scalar_lea.vmem [#allocation5], %s672
        %p674 = pneg %p105
        %p675 = pneg %p102
        %s676 = sand.u32 %s118, 1
        %s677 = sand.u32 %s118, 1
        %s678 = smul.addr %s677, 128
        %s679 = scalar_lea.vmem [#allocation6], %s678
        %p680 = pneg %p131
        %p681 = pneg %p128
        %s682 = smul.u32 8, %s22
        %p683 = scmp.lt.s32.totalorder %s682, 31
        %s684 = scalar_select %p683, %s682, 31
        %s685 = smul.addr %s684, 8
        %s686 = scalar_lea.vmem %s4, %s685
        %p687 = pneg %p157
        %p688 = pneg %p154
        %p689 = pneg %p178
        %p690 = pneg %p175
        %p691 = pneg %p199
        %p692 = pneg %p196
        %p693 = pneg %p225
        %p694 = pneg %p222
        %s695 = smul.u32 8, %s22
        %p696 = scmp.lt.s32.totalorder %s695, 31
        %s697 = scalar_select %p696, %s695, 31
        %s698 = smul.addr %s697, 8
        %s699 = scalar_lea.vmem %s7, %s698
        %s700 = smul.u32 2, %s22
        %s701 = smul.u32 16, %s23
        %s702 = smul.u32 8, %s22
        %s703 = smul.u32 8, %s22
        %p704 = scmp.lt.s32.totalorder %s703, 31
        %s705 = scalar_select %p704, %s703, 31
        %s706 = smul.addr %s705, 8
        %s707 = scalar_lea.vmem %s4, %s706
        %s708 = smul.u32 8, %s22
        %s709 = smul.u32 8, %s22
        %p710 = scmp.lt.s32.totalorder %s709, 31
        %s711 = scalar_select %p710, %s709, 31
        %s712 = smul.addr %s711, 8
        %s713 = scalar_lea.vmem %s7, %s712
        %s714 = smul.u32 8, %s22
        %p715 = scmp.eq.s32.totalorder %s23, 0
        // Predicated region
        $region197: #{hl_layer_forward.1} parent=179 // pred_check
          %p716 = pneg %p715
        $region198: #{hl_layer_forward.1} parent=179 // pred_check_branch
          %718 = sbr.rel (%p716) target = $region200
        $region199: #{hl_layer_forward.1} parent=179 // pred_region
          %vm719 = vcmask 261120
          %720 = vst.msk [vmem:[#allocation2] sm:$0xff] %vm719, 0.0
          %721 = vst.msk [vmem:[#allocation2 + $0x8] sm:$0xff] %vm719, 0.0
          %722 = vst.msk [vmem:[#allocation2 + $0x10] sm:$0xff] %vm719, 0.0
          %723 = vst.msk [vmem:[#allocation2 + $0x18] sm:$0xff] %vm719, 0.0
          %724 = vst.msk [vmem:[#allocation2 + $0x20] sm:$0xff] %vm719, 0.0
          %725 = vst.msk [vmem:[#allocation2 + $0x28] sm:$0xff] %vm719, 0.0
          %726 = vst.msk [vmem:[#allocation2 + $0x30] sm:$0xff] %vm719, 0.0
          %727 = vst.msk [vmem:[#allocation2 + $0x38] sm:$0xff] %vm719, 0.0
          %728 = vst.msk [vmem:[#allocation2 + $0x40] sm:$0xff] %vm719, 0.0
          %729 = vst.msk [vmem:[#allocation2 + $0x48] sm:$0xff] %vm719, 0.0
          %730 = vst.msk [vmem:[#allocation2 + $0x50] sm:$0xff] %vm719, 0.0
          %731 = vst.msk [vmem:[#allocation2 + $0x58] sm:$0xff] %vm719, 0.0
          %732 = vst.msk [vmem:[#allocation2 + $0x60] sm:$0xff] %vm719, 0.0
          %733 = vst.msk [vmem:[#allocation2 + $0x68] sm:$0xff] %vm719, 0.0
          %734 = vst.msk [vmem:[#allocation2 + $0x70] sm:$0xff] %vm719, 0.0
          %735 = vst.msk [vmem:[#allocation2 + $0x78] sm:$0xff] %vm719, 0.0
        $region200: #{hl_layer_forward.1} parent=179 // pred_fallthru
          _
        %v736 = vld [vmem:[%s633] sm:$0xff]
        %v737 = vld [vmem:[%s633 + $0x8] sm:$0xff]
        %v738 = vunpack.c.0.s8 %v736
        %v739 = vunpack.c.1.s8 %v736
        %v740 = vunpack.c.2.s8 %v736
        %v741 = vunpack.c.3.s8 %v736
        %v742 = vunpack.c.0.s8 %v737
        %v743 = vunpack.c.1.s8 %v737
        %v744 = vunpack.c.2.s8 %v737
        %v745 = vunpack.c.3.s8 %v737
        %v746 = vcvt.s32.f32 %v738
        %v747 = vcvt.s32.f32 %v739
        %v748 = vcvt.s32.f32 %v740
        %v749 = vcvt.s32.f32 %v741
        %v750 = vcvt.s32.f32 %v742
        %v751 = vcvt.s32.f32 %v743
        %v752 = vcvt.s32.f32 %v744
        %v753 = vcvt.s32.f32 %v745
        %v754 = vld [vmem:[%s654] sm:$0xff]
        %v755 = vld [vmem:[%s654 + $0x8] sm:$0xff]
        %v756 = vld [vmem:[%s654 + $0x10] sm:$0xff]
        %v757 = vld [vmem:[%s654 + $0x18] sm:$0xff]
        %v758 = vld [vmem:[%s654 + $0x20] sm:$0xff]
        %v759 = vld [vmem:[%s654 + $0x28] sm:$0xff]
        %v760 = vld [vmem:[%s654 + $0x30] sm:$0xff]
        %v761 = vld [vmem:[%s654 + $0x38] sm:$0xff]
        %v762 = vld [vmem:[%s647] sm:$0x1]
        %764 = vset.pattern.permute.xlu0 0
        %765 = vperm.xlu0 %764, %v754
        %v766 = vpop.permute.xlu0 %765
        %769 = vset.pattern.permute.xlu0 0
        %770 = vperm.xlu0 %769, %v755
        %v771 = vpop.permute.xlu0 %770
        %774 = vset.pattern.permute.xlu0 0
        %775 = vperm.xlu0 %774, %v756
        %v776 = vpop.permute.xlu0 %775
        %779 = vset.pattern.permute.xlu0 0
        %780 = vperm.xlu0 %779, %v757
        %v781 = vpop.permute.xlu0 %780
        %784 = vset.pattern.permute.xlu0 0
        %785 = vperm.xlu0 %784, %v758
        %v786 = vpop.permute.xlu0 %785
        %789 = vset.pattern.permute.xlu0 0
        %790 = vperm.xlu0 %789, %v759
        %v791 = vpop.permute.xlu0 %790
        %794 = vset.pattern.permute.xlu0 0
        %795 = vperm.xlu0 %794, %v760
        %v796 = vpop.permute.xlu0 %795
        %799 = vset.pattern.permute.xlu0 0
        %800 = vperm.xlu0 %799, %v761
        %v801 = vpop.permute.xlu0 %800
        %v804 = vlaneseq
        %v805 = vshrl.u32 %v804, 7
        %v806 = vsub.s32 0, %v805
        %v807 = vrot.slane %v762, %v806
        %v809 = vadd.f32 %v766, %v807
        %v810 = vadd.f32 %v771, %v807
        %v811 = vadd.f32 %v776, %v807
        %v812 = vadd.f32 %v781, %v807
        %v813 = vadd.f32 %v786, %v807
        %v814 = vadd.f32 %v791, %v807
        %v815 = vadd.f32 %v796, %v807
        %v816 = vadd.f32 %v801, %v807
        %v817 = vmul.f32 %v809, -0.1
        %v818 = vmul.f32 %v810, -0.1
        %v819 = vmul.f32 %v811, -0.1
        %v820 = vmul.f32 %v812, -0.1
        %v821 = vmul.f32 %v813, -0.1
        %v822 = vmul.f32 %v814, -0.1
        %v823 = vmul.f32 %v815, -0.1
        %v824 = vmul.f32 %v816, -0.1
        %v825 = vmax.f32 %v809, %v817
        %v826 = vmax.f32 %v810, %v818
        %v827 = vmax.f32 %v811, %v819
        %v828 = vmax.f32 %v812, %v820
        %v829 = vmax.f32 %v813, %v821
        %v830 = vmax.f32 %v814, %v822
        %v831 = vmax.f32 %v815, %v823
        %v832 = vmax.f32 %v816, %v824
        %v833 = vmul.f32 %v825, %v746
        %v834 = vmul.f32 %v826, %v747
        %v835 = vmul.f32 %v827, %v748
        %v836 = vmul.f32 %v828, %v749
        %v837 = vmul.f32 %v829, %v750
        %v838 = vmul.f32 %v830, %v751
        %v839 = vmul.f32 %v831, %v752
        %v840 = vmul.f32 %v832, %v753
        %v841 = vld [vmem:[#allocation2] sm:$0xff]
        %v842 = vld [vmem:[#allocation2 + $0x8] sm:$0xff]
        %v843 = vld [vmem:[#allocation2 + $0x10] sm:$0xff]
        %v844 = vld [vmem:[#allocation2 + $0x18] sm:$0xff]
        %v845 = vld [vmem:[#allocation2 + $0x20] sm:$0xff]
        %v846 = vld [vmem:[#allocation2 + $0x28] sm:$0xff]
        %v847 = vld [vmem:[#allocation2 + $0x30] sm:$0xff]
        %v848 = vld [vmem:[#allocation2 + $0x38] sm:$0xff]
        %v849 = vld [vmem:[%s640] sm:$0xff]
        %v850 = vld [vmem:[%s640 + $0x8] sm:$0xff]
        %v851 = vld [vmem:[%s640 + $0x10] sm:$0xff]
        %v852 = vld [vmem:[%s640 + $0x18] sm:$0xff]
        %v853 = vld [vmem:[%s640 + $0x20] sm:$0xff]
        %v854 = vld [vmem:[%s640 + $0x28] sm:$0xff]
        %v855 = vld [vmem:[%s640 + $0x30] sm:$0xff]
        %v856 = vld [vmem:[%s640 + $0x38] sm:$0xff]
        %v857 = vld [vmem:[%s640 + $0x40] sm:$0xff]
        %v858 = vld [vmem:[%s640 + $0x48] sm:$0xff]
        %v859 = vld [vmem:[%s640 + $0x50] sm:$0xff]
        %v860 = vld [vmem:[%s640 + $0x58] sm:$0xff]
        %v861 = vld [vmem:[%s640 + $0x60] sm:$0xff]
        %v862 = vld [vmem:[%s640 + $0x68] sm:$0xff]
        %v863 = vld [vmem:[%s640 + $0x70] sm:$0xff]
        %v864 = vld [vmem:[%s640 + $0x78] sm:$0xff]
        %865 = vmatprep.subr.mxu0 0.0
        %866 = vmatpush1.msra.mxu0 %v864
        %867 = vmatprep.subr.mxu0 0.0
        %868 = vmatpush1.msra.mxu0 %v863
        %869 = vmatprep.subr.mxu0 0.0
        %870 = vmatpush1.msra.mxu0 %v862
        %871 = vmatprep.subr.mxu0 0.0
        %872 = vmatpush1.msra.mxu0 %v861
        %873 = vmatprep.subr.mxu0 0.0
        %874 = vmatpush1.msra.mxu0 %v860
        %875 = vmatprep.subr.mxu0 0.0
        %876 = vmatpush1.msra.mxu0 %v859
        %877 = vmatprep.subr.mxu0 0.0
        %878 = vmatpush1.msra.mxu0 %v858
        %879 = vmatprep.subr.mxu0 0.0
        %880 = vmatpush1.msra.mxu0 %v857
        %881 = vmatprep.subr.mxu0 0.0
        %882 = vmatpush1.msra.mxu0 %v856
        %883 = vmatprep.subr.mxu0 0.0
        %884 = vmatpush1.msra.mxu0 %v855
        %885 = vmatprep.subr.mxu0 0.0
        %886 = vmatpush1.msra.mxu0 %v854
        %887 = vmatprep.subr.mxu0 0.0
        %888 = vmatpush1.msra.mxu0 %v853
        %889 = vmatprep.subr.mxu0 0.0
        %890 = vmatpush1.msra.mxu0 %v852
        %891 = vmatprep.subr.mxu0 0.0
        %892 = vmatpush1.msra.mxu0 %v851
        %893 = vmatprep.subr.mxu0 0.0
        %894 = vmatpush1.msra.mxu0 %v850
        %895 = vmatprep.subr.mxu0 0.0
        %896 = vmatpush1.msra.mxu0 %v849
        %897 = vmatprep.subr.mxu0 0.0
        %898 = vmatpush2.msra.mxu0 0.0
        %899 = vmatprep.subr.mxu0 0.0
        %900 = vmatpush2.msra.mxu0 0.0
        %901 = vmatprep.subr.mxu0 0.0
        %902 = vmatpush2.msra.mxu0 0.0
        %903 = vmatprep.subr.mxu0 0.0
        %904 = vmatpush2.msra.mxu0 0.0
        %905 = vmatprep.subr.mxu0 0.0
        %906 = vmatpush2.msra.mxu0 0.0
        %907 = vmatprep.subr.mxu0 0.0
        %908 = vmatpush2.msra.mxu0 0.0
        %909 = vmatprep.subr.mxu0 0.0
        %910 = vmatpush2.msra.mxu0 0.0
        %911 = vmatprep.subr.mxu0 0.0
        %912 = vmatpush2.msra.mxu0 0.0
        %913 = vmatprep.subr.mxu0 0.0
        %914 = vmatpush2.msra.mxu0 0.0
        %915 = vmatprep.subr.mxu0 0.0
        %916 = vmatpush2.msra.mxu0 0.0
        %917 = vmatprep.subr.mxu0 0.0
        %918 = vmatpush2.msra.mxu0 0.0
        %919 = vmatprep.subr.mxu0 0.0
        %920 = vmatpush2.msra.mxu0 0.0
        %921 = vmatprep.subr.mxu0 0.0
        %922 = vmatpush2.msra.mxu0 0.0
        %923 = vmatprep.subr.mxu0 0.0
        %924 = vmatpush2.msra.mxu0 0.0
        %925 = vmatprep.subr.mxu0 0.0
        %926 = vmatpush2.msra.mxu0 0.0
        %927 = vmatprep.subr.mxu0 0.0
        %928 = vmatpush2.msra.mxu0 0.0
        %929 = vmatprep.mubr.f32.mxu0 0.0
        %930 = vmatmul.mubr.f32.gmra.mxu0 %v833
        %v931 = vpop.f32.mrf.mxu0
        %v932 = vadd.f32 0.0, %v931
        %v933 = vpop.f32.mrf.mxu0
        %934 = vmatprep.mubr.f32.mxu0 0.0
        %935 = vmatmul.mubr.f32.gmra.mxu0 %v834
        %v936 = vpop.f32.mrf.mxu0
        %v937 = vadd.f32 0.0, %v936
        %v938 = vpop.f32.mrf.mxu0
        %939 = vmatprep.mubr.f32.mxu0 0.0
        %940 = vmatmul.mubr.f32.gmra.mxu0 %v835
        %v941 = vpop.f32.mrf.mxu0
        %v942 = vadd.f32 0.0, %v941
        %v943 = vpop.f32.mrf.mxu0
        %944 = vmatprep.mubr.f32.mxu0 0.0
        %945 = vmatmul.mubr.f32.gmra.mxu0 %v836
        %v946 = vpop.f32.mrf.mxu0
        %v947 = vadd.f32 0.0, %v946
        %v948 = vpop.f32.mrf.mxu0
        %949 = vmatprep.mubr.f32.mxu0 0.0
        %950 = vmatmul.mubr.f32.gmra.mxu0 %v837
        %v951 = vpop.f32.mrf.mxu0
        %v952 = vadd.f32 0.0, %v951
        %v953 = vpop.f32.mrf.mxu0
        %954 = vmatprep.mubr.f32.mxu0 0.0
        %955 = vmatmul.mubr.f32.gmra.mxu0 %v838
        %v956 = vpop.f32.mrf.mxu0
        %v957 = vadd.f32 0.0, %v956
        %v958 = vpop.f32.mrf.mxu0
        %959 = vmatprep.mubr.f32.mxu0 0.0
        %960 = vmatmul.mubr.f32.gmra.mxu0 %v839
        %v961 = vpop.f32.mrf.mxu0
        %v962 = vadd.f32 0.0, %v961
        %v963 = vpop.f32.mrf.mxu0
        %964 = vmatprep.mubr.f32.mxu0 0.0
        %965 = vmatmul.mubr.f32.gmra.mxu0 %v840
        %v966 = vpop.f32.mrf.mxu0
        %v967 = vadd.f32 0.0, %v966
        %v968 = vpop.f32.mrf.mxu0
        %969 = vdwg.mxu0
        %v970 = vadd.f32 %v841, %v932
        %v971 = vadd.f32 %v842, %v937
        %v972 = vadd.f32 %v843, %v942
        %v973 = vadd.f32 %v844, %v947
        %v974 = vadd.f32 %v845, %v952
        %v975 = vadd.f32 %v846, %v957
        %v976 = vadd.f32 %v847, %v962
        %v977 = vadd.f32 %v848, %v967
        %vm978 = vcmask 261120
        %979 = vst.msk [vmem:[#allocation2] sm:$0xff] %vm978, %v970
        %980 = vst.msk [vmem:[#allocation2 + $0x8] sm:$0xff] %vm978, %v971
        %981 = vst.msk [vmem:[#allocation2 + $0x10] sm:$0xff] %vm978, %v972
        %982 = vst.msk [vmem:[#allocation2 + $0x18] sm:$0xff] %vm978, %v973
        %983 = vst.msk [vmem:[#allocation2 + $0x20] sm:$0xff] %vm978, %v974
        %984 = vst.msk [vmem:[#allocation2 + $0x28] sm:$0xff] %vm978, %v975
        %985 = vst.msk [vmem:[#allocation2 + $0x30] sm:$0xff] %vm978, %v976
        %986 = vst.msk [vmem:[#allocation2 + $0x38] sm:$0xff] %vm978, %v977
        %s987 = scalar_lea.vmem %s654, 64 [#allocation6]
        %v988 = vld [vmem:[%s987] sm:$0xff]
        %v989 = vld [vmem:[%s987 + $0x8] sm:$0xff]
        %v990 = vld [vmem:[%s987 + $0x10] sm:$0xff]
        %v991 = vld [vmem:[%s987 + $0x18] sm:$0xff]
        %v992 = vld [vmem:[%s987 + $0x20] sm:$0xff]
        %v993 = vld [vmem:[%s987 + $0x28] sm:$0xff]
        %v994 = vld [vmem:[%s987 + $0x30] sm:$0xff]
        %v995 = vld [vmem:[%s987 + $0x38] sm:$0xff]
        %s996 = scalar_lea.vmem %s647, 1 [#allocation5]
        %v997 = vld [vmem:[%s996] sm:$0x1]
        %999 = vset.pattern.permute.xlu0 0
        %1000 = vperm.xlu0 %999, %v988
        %v1001 = vpop.permute.xlu0 %1000
        %1004 = vset.pattern.permute.xlu0 0
        %1005 = vperm.xlu0 %1004, %v989
        %v1006 = vpop.permute.xlu0 %1005
        %1009 = vset.pattern.permute.xlu0 0
        %1010 = vperm.xlu0 %1009, %v990
        %v1011 = vpop.permute.xlu0 %1010
        %1014 = vset.pattern.permute.xlu0 0
        %1015 = vperm.xlu0 %1014, %v991
        %v1016 = vpop.permute.xlu0 %1015
        %1019 = vset.pattern.permute.xlu0 0
        %1020 = vperm.xlu0 %1019, %v992
        %v1021 = vpop.permute.xlu0 %1020
        %1024 = vset.pattern.permute.xlu0 0
        %1025 = vperm.xlu0 %1024, %v993
        %v1026 = vpop.permute.xlu0 %1025
        %1029 = vset.pattern.permute.xlu0 0
        %1030 = vperm.xlu0 %1029, %v994
        %v1031 = vpop.permute.xlu0 %1030
        %1034 = vset.pattern.permute.xlu0 0
        %1035 = vperm.xlu0 %1034, %v995
        %v1036 = vpop.permute.xlu0 %1035
        %v1039 = vlaneseq
        %v1040 = vshrl.u32 %v1039, 7
        %v1041 = vsub.s32 0, %v1040
        %v1042 = vrot.slane %v997, %v1041
        %v1044 = vadd.f32 %v1001, %v1042
        %v1045 = vadd.f32 %v1006, %v1042
        %v1046 = vadd.f32 %v1011, %v1042
        %v1047 = vadd.f32 %v1016, %v1042
        %v1048 = vadd.f32 %v1021, %v1042
        %v1049 = vadd.f32 %v1026, %v1042
        %v1050 = vadd.f32 %v1031, %v1042
        %v1051 = vadd.f32 %v1036, %v1042
        %v1052 = vmul.f32 %v1044, -0.1
        %v1053 = vmul.f32 %v1045, -0.1
        %v1054 = vmul.f32 %v1046, -0.1
        %v1055 = vmul.f32 %v1047, -0.1
        %v1056 = vmul.f32 %v1048, -0.1
        %v1057 = vmul.f32 %v1049, -0.1
        %v1058 = vmul.f32 %v1050, -0.1
        %v1059 = vmul.f32 %v1051, -0.1
        %v1060 = vmax.f32 %v1044, %v1052
        %v1061 = vmax.f32 %v1045, %v1053
        %v1062 = vmax.f32 %v1046, %v1054
        %v1063 = vmax.f32 %v1047, %v1055
        %v1064 = vmax.f32 %v1048, %v1056
        %v1065 = vmax.f32 %v1049, %v1057
        %v1066 = vmax.f32 %v1050, %v1058
        %v1067 = vmax.f32 %v1051, %v1059
        %v1068 = vmul.f32 %v1060, %v746
        %v1069 = vmul.f32 %v1061, %v747
        %v1070 = vmul.f32 %v1062, %v748
        %v1071 = vmul.f32 %v1063, %v749
        %v1072 = vmul.f32 %v1064, %v750
        %v1073 = vmul.f32 %v1065, %v751
        %v1074 = vmul.f32 %v1066, %v752
        %v1075 = vmul.f32 %v1067, %v753
        %s1076 = scalar_lea.vmem [#allocation2], 64
        %v1077 = vld [vmem:[%s1076] sm:$0xff]
        %v1078 = vld [vmem:[%s1076 + $0x8] sm:$0xff]
        %v1079 = vld [vmem:[%s1076 + $0x10] sm:$0xff]
        %v1080 = vld [vmem:[%s1076 + $0x18] sm:$0xff]
        %v1081 = vld [vmem:[%s1076 + $0x20] sm:$0xff]
        %v1082 = vld [vmem:[%s1076 + $0x28] sm:$0xff]
        %v1083 = vld [vmem:[%s1076 + $0x30] sm:$0xff]
        %v1084 = vld [vmem:[%s1076 + $0x38] sm:$0xff]
        %s1085 = scalar_lea.vmem %s640, 128 [#allocation4]
        %v1086 = vld [vmem:[%s1085] sm:$0xff]
        %v1087 = vld [vmem:[%s1085 + $0x8] sm:$0xff]
        %v1088 = vld [vmem:[%s1085 + $0x10] sm:$0xff]
        %v1089 = vld [vmem:[%s1085 + $0x18] sm:$0xff]
        %v1090 = vld [vmem:[%s1085 + $0x20] sm:$0xff]
        %v1091 = vld [vmem:[%s1085 + $0x28] sm:$0xff]
        %v1092 = vld [vmem:[%s1085 + $0x30] sm:$0xff]
        %v1093 = vld [vmem:[%s1085 + $0x38] sm:$0xff]
        %v1094 = vld [vmem:[%s1085 + $0x40] sm:$0xff]
        %v1095 = vld [vmem:[%s1085 + $0x48] sm:$0xff]
        %v1096 = vld [vmem:[%s1085 + $0x50] sm:$0xff]
        %v1097 = vld [vmem:[%s1085 + $0x58] sm:$0xff]
        %v1098 = vld [vmem:[%s1085 + $0x60] sm:$0xff]
        %v1099 = vld [vmem:[%s1085 + $0x68] sm:$0xff]
        %v1100 = vld [vmem:[%s1085 + $0x70] sm:$0xff]
        %v1101 = vld [vmem:[%s1085 + $0x78] sm:$0xff]
        %1102 = vmatprep.subr.mxu0 0.0
        %1103 = vmatpush1.msra.mxu0 %v1101
        %1104 = vmatprep.subr.mxu0 0.0
        %1105 = vmatpush1.msra.mxu0 %v1100
        %1106 = vmatprep.subr.mxu0 0.0
        %1107 = vmatpush1.msra.mxu0 %v1099
        %1108 = vmatprep.subr.mxu0 0.0
        %1109 = vmatpush1.msra.mxu0 %v1098
        %1110 = vmatprep.subr.mxu0 0.0
        %1111 = vmatpush1.msra.mxu0 %v1097
        %1112 = vmatprep.subr.mxu0 0.0
        %1113 = vmatpush1.msra.mxu0 %v1096
        %1114 = vmatprep.subr.mxu0 0.0
        %1115 = vmatpush1.msra.mxu0 %v1095
        %1116 = vmatprep.subr.mxu0 0.0
        %1117 = vmatpush1.msra.mxu0 %v1094
        %1118 = vmatprep.subr.mxu0 0.0
        %1119 = vmatpush1.msra.mxu0 %v1093
        %1120 = vmatprep.subr.mxu0 0.0
        %1121 = vmatpush1.msra.mxu0 %v1092
        %1122 = vmatprep.subr.mxu0 0.0
        %1123 = vmatpush1.msra.mxu0 %v1091
        %1124 = vmatprep.subr.mxu0 0.0
        %1125 = vmatpush1.msra.mxu0 %v1090
        %1126 = vmatprep.subr.mxu0 0.0
        %1127 = vmatpush1.msra.mxu0 %v1089
        %1128 = vmatprep.subr.mxu0 0.0
        %1129 = vmatpush1.msra.mxu0 %v1088
        %1130 = vmatprep.subr.mxu0 0.0
        %1131 = vmatpush1.msra.mxu0 %v1087
        %1132 = vmatprep.subr.mxu0 0.0
        %1133 = vmatpush1.msra.mxu0 %v1086
        %1134 = vmatprep.subr.mxu0 0.0
        %1135 = vmatpush2.msra.mxu0 0.0
        %1136 = vmatprep.subr.mxu0 0.0
        %1137 = vmatpush2.msra.mxu0 0.0
        %1138 = vmatprep.subr.mxu0 0.0
        %1139 = vmatpush2.msra.mxu0 0.0
        %1140 = vmatprep.subr.mxu0 0.0
        %1141 = vmatpush2.msra.mxu0 0.0
        %1142 = vmatprep.subr.mxu0 0.0
        %1143 = vmatpush2.msra.mxu0 0.0
        %1144 = vmatprep.subr.mxu0 0.0
        %1145 = vmatpush2.msra.mxu0 0.0
        %1146 = vmatprep.subr.mxu0 0.0
        %1147 = vmatpush2.msra.mxu0 0.0
        %1148 = vmatprep.subr.mxu0 0.0
        %1149 = vmatpush2.msra.mxu0 0.0
        %1150 = vmatprep.subr.mxu0 0.0
        %1151 = vmatpush2.msra.mxu0 0.0
        %1152 = vmatprep.subr.mxu0 0.0
        %1153 = vmatpush2.msra.mxu0 0.0
        %1154 = vmatprep.subr.mxu0 0.0
        %1155 = vmatpush2.msra.mxu0 0.0
        %1156 = vmatprep.subr.mxu0 0.0
        %1157 = vmatpush2.msra.mxu0 0.0
        %1158 = vmatprep.subr.mxu0 0.0
        %1159 = vmatpush2.msra.mxu0 0.0
        %1160 = vmatprep.subr.mxu0 0.0
        %1161 = vmatpush2.msra.mxu0 0.0
        %1162 = vmatprep.subr.mxu0 0.0
        %1163 = vmatpush2.msra.mxu0 0.0
        %1164 = vmatprep.subr.mxu0 0.0
        %1165 = vmatpush2.msra.mxu0 0.0
        %1166 = vmatprep.mubr.f32.mxu0 0.0
        %1167 = vmatmul.mubr.f32.gmra.mxu0 %v1068
        %v1168 = vpop.f32.mrf.mxu0
        %v1169 = vadd.f32 0.0, %v1168
        %v1170 = vpop.f32.mrf.mxu0
        %1171 = vmatprep.mubr.f32.mxu0 0.0
        %1172 = vmatmul.mubr.f32.gmra.mxu0 %v1069
        %v1173 = vpop.f32.mrf.mxu0
        %v1174 = vadd.f32 0.0, %v1173
        %v1175 = vpop.f32.mrf.mxu0
        %1176 = vmatprep.mubr.f32.mxu0 0.0
        %1177 = vmatmul.mubr.f32.gmra.mxu0 %v1070
        %v1178 = vpop.f32.mrf.mxu0
        %v1179 = vadd.f32 0.0, %v1178
        %v1180 = vpop.f32.mrf.mxu0
        %1181 = vmatprep.mubr.f32.mxu0 0.0
        %1182 = vmatmul.mubr.f32.gmra.mxu0 %v1071
        %v1183 = vpop.f32.mrf.mxu0
        %v1184 = vadd.f32 0.0, %v1183
        %v1185 = vpop.f32.mrf.mxu0
        %1186 = vmatprep.mubr.f32.mxu0 0.0
        %1187 = vmatmul.mubr.f32.gmra.mxu0 %v1072
        %v1188 = vpop.f32.mrf.mxu0
        %v1189 = vadd.f32 0.0, %v1188
        %v1190 = vpop.f32.mrf.mxu0
        %1191 = vmatprep.mubr.f32.mxu0 0.0
        %1192 = vmatmul.mubr.f32.gmra.mxu0 %v1073
        %v1193 = vpop.f32.mrf.mxu0
        %v1194 = vadd.f32 0.0, %v1193
        %v1195 = vpop.f32.mrf.mxu0
        %1196 = vmatprep.mubr.f32.mxu0 0.0
        %1197 = vmatmul.mubr.f32.gmra.mxu0 %v1074
        %v1198 = vpop.f32.mrf.mxu0
        %v1199 = vadd.f32 0.0, %v1198
        %v1200 = vpop.f32.mrf.mxu0
        %1201 = vmatprep.mubr.f32.mxu0 0.0
        %1202 = vmatmul.mubr.f32.gmra.mxu0 %v1075
        %v1203 = vpop.f32.mrf.mxu0
        %v1204 = vadd.f32 0.0, %v1203
        %v1205 = vpop.f32.mrf.mxu0
        %1206 = vdwg.mxu0
        %v1207 = vadd.f32 %v1077, %v1169
        %v1208 = vadd.f32 %v1078, %v1174
        %v1209 = vadd.f32 %v1079, %v1179
        %v1210 = vadd.f32 %v1080, %v1184
        %v1211 = vadd.f32 %v1081, %v1189
        %v1212 = vadd.f32 %v1082, %v1194
        %v1213 = vadd.f32 %v1083, %v1199
        %v1214 = vadd.f32 %v1084, %v1204
        %1215 = vst.msk [vmem:[%s1076] sm:$0xff] %vm978, %v1207
        %1216 = vst.msk [vmem:[%s1076 + $0x8] sm:$0xff] %vm978, %v1208
        %1217 = vst.msk [vmem:[%s1076 + $0x10] sm:$0xff] %vm978, %v1209
        %1218 = vst.msk [vmem:[%s1076 + $0x18] sm:$0xff] %vm978, %v1210
        %1219 = vst.msk [vmem:[%s1076 + $0x20] sm:$0xff] %vm978, %v1211
        %1220 = vst.msk [vmem:[%s1076 + $0x28] sm:$0xff] %vm978, %v1212
        %1221 = vst.msk [vmem:[%s1076 + $0x30] sm:$0xff] %vm978, %v1213
        %1222 = vst.msk [vmem:[%s1076 + $0x38] sm:$0xff] %vm978, %v1214
        %p1223 = scmp.eq.s32.totalorder %s23, 1
        // Predicated region
        $region201: #{hl_layer_forward.1} parent=179 // pred_check
          %p1224 = pneg %p1223
        $region202: #{hl_layer_forward.1} parent=179 // pred_check_branch
          %1226 = sbr.rel (%p1224) target = $region204
        $region203: #{hl_layer_forward.1} parent=179 // pred_region
          %v1227 = vld [vmem:[%s707] sm:$0xff]
          %v1228 = vld [vmem:[%s707 + $0x8] sm:$0xff]
          %v1229 = vld [vmem:[%s707 + $0x10] sm:$0xff]
          %v1230 = vld [vmem:[%s707 + $0x18] sm:$0xff]
          %v1231 = vld [vmem:[%s707 + $0x20] sm:$0xff]
          %v1232 = vld [vmem:[%s707 + $0x28] sm:$0xff]
          %v1233 = vld [vmem:[%s707 + $0x30] sm:$0xff]
          %v1234 = vld [vmem:[%s707 + $0x38] sm:$0xff]
          %v1235 = vld [vmem:[%s6] sm:$0x1]
          %v1237 = vlaneseq
          %v1238 = vshrl.u32 %v1237, 7
          %v1239 = vsub.s32 0, %v1238
          %v1240 = vrot.slane %v1235, %v1239
          %v1242 = vld [vmem:[#allocation2] sm:$0xff]
          %v1243 = vld [vmem:[#allocation2 + $0x8] sm:$0xff]
          %v1244 = vld [vmem:[#allocation2 + $0x10] sm:$0xff]
          %v1245 = vld [vmem:[#allocation2 + $0x18] sm:$0xff]
          %v1246 = vld [vmem:[#allocation2 + $0x20] sm:$0xff]
          %v1247 = vld [vmem:[#allocation2 + $0x28] sm:$0xff]
          %v1248 = vld [vmem:[#allocation2 + $0x30] sm:$0xff]
          %v1249 = vld [vmem:[#allocation2 + $0x38] sm:$0xff]
          %1251 = vset.pattern.permute.xlu0 0
          %1252 = vperm.xlu0 %1251, %v1227
          %v1253 = vpop.permute.xlu0 %1252
          %1256 = vset.pattern.permute.xlu0 0
          %1257 = vperm.xlu0 %1256, %v1228
          %v1258 = vpop.permute.xlu0 %1257
          %1261 = vset.pattern.permute.xlu0 0
          %1262 = vperm.xlu0 %1261, %v1229
          %v1263 = vpop.permute.xlu0 %1262
          %1266 = vset.pattern.permute.xlu0 0
          %1267 = vperm.xlu0 %1266, %v1230
          %v1268 = vpop.permute.xlu0 %1267
          %1271 = vset.pattern.permute.xlu0 0
          %1272 = vperm.xlu0 %1271, %v1231
          %v1273 = vpop.permute.xlu0 %1272
          %1276 = vset.pattern.permute.xlu0 0
          %1277 = vperm.xlu0 %1276, %v1232
          %v1278 = vpop.permute.xlu0 %1277
          %1281 = vset.pattern.permute.xlu0 0
          %1282 = vperm.xlu0 %1281, %v1233
          %v1283 = vpop.permute.xlu0 %1282
          %1286 = vset.pattern.permute.xlu0 0
          %1287 = vperm.xlu0 %1286, %v1234
          %v1288 = vpop.permute.xlu0 %1287
          %v1290 = vmul.f32 %v1253, %v1242
          %v1291 = vmul.f32 %v1258, %v1243
          %v1292 = vmul.f32 %v1263, %v1244
          %v1293 = vmul.f32 %v1268, %v1245
          %v1294 = vmul.f32 %v1273, %v1246
          %v1295 = vmul.f32 %v1278, %v1247
          %v1296 = vmul.f32 %v1283, %v1248
          %v1297 = vmul.f32 %v1288, %v1249
          %v1298 = vld [vmem:[%s5] sm:$0xff]
          %v1299 = vld [vmem:[%s5 + $0x8] sm:$0xff]
          %v1300 = vld [vmem:[%s5 + $0x10] sm:$0xff]
          %v1301 = vld [vmem:[%s5 + $0x18] sm:$0xff]
          %v1303 = vsel %vm978, %v1290, 0
          %v1306 = vsel %vm978, %v1291, 0
          %v1309 = vsel %vm978, %v1292, 0
          %v1312 = vsel %vm978, %v1293, 0
          %v1315 = vsel %vm978, %v1294, 0
          %v1318 = vsel %vm978, %v1295, 0
          %v1321 = vsel %vm978, %v1296, 0
          %v1324 = vsel %vm978, %v1297, 0
          %1326 = vmatprep.subr.mxu0 0.0
          %1327 = vmatpush1.msra.mxu0 0.0
          %1328 = vmatprep.subr.mxu0 0.0
          %1329 = vmatpush1.msra.mxu0 0.0
          %1330 = vmatprep.subr.mxu0 0.0
          %1331 = vmatpush1.msra.mxu0 0.0
          %1332 = vmatprep.subr.mxu0 0.0
          %1333 = vmatpush1.msra.mxu0 0.0
          %1334 = vmatprep.subr.mxu0 0.0
          %1335 = vmatpush1.msra.mxu0 0.0
          %1336 = vmatprep.subr.mxu0 0.0
          %1337 = vmatpush1.msra.mxu0 0.0
          %1338 = vmatprep.subr.mxu0 0.0
          %1339 = vmatpush1.msra.mxu0 0.0
          %1340 = vmatprep.subr.mxu0 0.0
          %1341 = vmatpush1.msra.mxu0 0.0
          %1342 = vmatprep.subr.mxu0 0.0
          %1343 = vmatpush1.msra.mxu0 0.0
          %1344 = vmatprep.subr.mxu0 0.0
          %1345 = vmatpush1.msra.mxu0 0.0
          %1346 = vmatprep.subr.mxu0 0.0
          %1347 = vmatpush1.msra.mxu0 0.0
          %1348 = vmatprep.subr.mxu0 0.0
          %1349 = vmatpush1.msra.mxu0 0.0
          %1350 = vmatprep.subr.mxu0 0.0
          %1351 = vmatpush1.msra.mxu0 %v1301
          %1352 = vmatprep.subr.mxu0 0.0
          %1353 = vmatpush1.msra.mxu0 %v1300
          %1354 = vmatprep.subr.mxu0 0.0
          %1355 = vmatpush1.msra.mxu0 %v1299
          %1356 = vmatprep.subr.mxu0 0.0
          %1357 = vmatpush1.msra.mxu0 %v1298
          %1358 = vmatprep.subr.mxu0 0.0
          %1359 = vmatpush2.msra.mxu0 0.0
          %1360 = vmatprep.subr.mxu0 0.0
          %1361 = vmatpush2.msra.mxu0 0.0
          %1362 = vmatprep.subr.mxu0 0.0
          %1363 = vmatpush2.msra.mxu0 0.0
          %1364 = vmatprep.subr.mxu0 0.0
          %1365 = vmatpush2.msra.mxu0 0.0
          %1366 = vmatprep.subr.mxu0 0.0
          %1367 = vmatpush2.msra.mxu0 0.0
          %1368 = vmatprep.subr.mxu0 0.0
          %1369 = vmatpush2.msra.mxu0 0.0
          %1370 = vmatprep.subr.mxu0 0.0
          %1371 = vmatpush2.msra.mxu0 0.0
          %1372 = vmatprep.subr.mxu0 0.0
          %1373 = vmatpush2.msra.mxu0 0.0
          %1374 = vmatprep.subr.mxu0 0.0
          %1375 = vmatpush2.msra.mxu0 0.0
          %1376 = vmatprep.subr.mxu0 0.0
          %1377 = vmatpush2.msra.mxu0 0.0
          %1378 = vmatprep.subr.mxu0 0.0
          %1379 = vmatpush2.msra.mxu0 0.0
          %1380 = vmatprep.subr.mxu0 0.0
          %1381 = vmatpush2.msra.mxu0 0.0
          %1382 = vmatprep.subr.mxu0 0.0
          %1383 = vmatpush2.msra.mxu0 0.0
          %1384 = vmatprep.subr.mxu0 0.0
          %1385 = vmatpush2.msra.mxu0 0.0
          %1386 = vmatprep.subr.mxu0 0.0
          %1387 = vmatpush2.msra.mxu0 0.0
          %1388 = vmatprep.subr.mxu0 0.0
          %1389 = vmatpush2.msra.mxu0 0.0
          %1390 = vmatprep.mubr.f32.mxu0 0.0
          %1391 = vmatmul.mubr.f32.gmra.mxu0 %v1303
          %v1392 = vpop.f32.mrf.mxu0
          %v1393 = vadd.f32 0.0, %v1392
          %v1394 = vpop.f32.mrf.mxu0
          %1395 = vmatprep.mubr.f32.mxu0 0.0
          %1396 = vmatmul.mubr.f32.gmra.mxu0 %v1306
          %v1397 = vpop.f32.mrf.mxu0
          %v1398 = vadd.f32 0.0, %v1397
          %v1399 = vpop.f32.mrf.mxu0
          %1400 = vmatprep.mubr.f32.mxu0 0.0
          %1401 = vmatmul.mubr.f32.gmra.mxu0 %v1309
          %v1402 = vpop.f32.mrf.mxu0
          %v1403 = vadd.f32 0.0, %v1402
          %v1404 = vpop.f32.mrf.mxu0
          %1405 = vmatprep.mubr.f32.mxu0 0.0
          %1406 = vmatmul.mubr.f32.gmra.mxu0 %v1312
          %v1407 = vpop.f32.mrf.mxu0
          %v1408 = vadd.f32 0.0, %v1407
          %v1409 = vpop.f32.mrf.mxu0
          %1410 = vmatprep.mubr.f32.mxu0 0.0
          %1411 = vmatmul.mubr.f32.gmra.mxu0 %v1315
          %v1412 = vpop.f32.mrf.mxu0
          %v1413 = vadd.f32 0.0, %v1412
          %v1414 = vpop.f32.mrf.mxu0
          %1415 = vmatprep.mubr.f32.mxu0 0.0
          %1416 = vmatmul.mubr.f32.gmra.mxu0 %v1318
          %v1417 = vpop.f32.mrf.mxu0
          %v1418 = vadd.f32 0.0, %v1417
          %v1419 = vpop.f32.mrf.mxu0
          %1420 = vmatprep.mubr.f32.mxu0 0.0
          %1421 = vmatmul.mubr.f32.gmra.mxu0 %v1321
          %v1422 = vpop.f32.mrf.mxu0
          %v1423 = vadd.f32 0.0, %v1422
          %v1424 = vpop.f32.mrf.mxu0
          %1425 = vmatprep.mubr.f32.mxu0 0.0
          %1426 = vmatmul.mubr.f32.gmra.mxu0 %v1324
          %v1427 = vpop.f32.mrf.mxu0
          %v1428 = vadd.f32 0.0, %v1427
          %v1429 = vpop.f32.mrf.mxu0
          %1430 = vdwg.mxu0
          %v1431 = vadd.f32 %v1240, %v1393
          %v1432 = vadd.f32 %v1240, %v1398
          %v1433 = vadd.f32 %v1240, %v1403
          %v1434 = vadd.f32 %v1240, %v1408
          %v1435 = vadd.f32 %v1240, %v1413
          %v1436 = vadd.f32 %v1240, %v1418
          %v1437 = vadd.f32 %v1240, %v1423
          %v1438 = vadd.f32 %v1240, %v1428
          %v1439 = vld [vmem:[%s1076] sm:$0xff]
          %v1440 = vld [vmem:[%s1076 + $0x8] sm:$0xff]
          %v1441 = vld [vmem:[%s1076 + $0x10] sm:$0xff]
          %v1442 = vld [vmem:[%s1076 + $0x18] sm:$0xff]
          %v1443 = vld [vmem:[%s1076 + $0x20] sm:$0xff]
          %v1444 = vld [vmem:[%s1076 + $0x28] sm:$0xff]
          %v1445 = vld [vmem:[%s1076 + $0x30] sm:$0xff]
          %v1446 = vld [vmem:[%s1076 + $0x38] sm:$0xff]
          %v1447 = vmul.f32 %v1253, %v1439
          %v1448 = vmul.f32 %v1258, %v1440
          %v1449 = vmul.f32 %v1263, %v1441
          %v1450 = vmul.f32 %v1268, %v1442
          %v1451 = vmul.f32 %v1273, %v1443
          %v1452 = vmul.f32 %v1278, %v1444
          %v1453 = vmul.f32 %v1283, %v1445
          %v1454 = vmul.f32 %v1288, %v1446
          %s1455 = scalar_lea.vmem %s5, 32
          %v1456 = vld [vmem:[%s1455] sm:$0xff]
          %v1457 = vld [vmem:[%s1455 + $0x8] sm:$0xff]
          %v1458 = vld [vmem:[%s1455 + $0x10] sm:$0xff]
          %v1459 = vld [vmem:[%s1455 + $0x18] sm:$0xff]
          %v1461 = vsel %vm978, %v1447, 0
          %v1464 = vsel %vm978, %v1448, 0
          %v1467 = vsel %vm978, %v1449, 0
          %v1470 = vsel %vm978, %v1450, 0
          %v1473 = vsel %vm978, %v1451, 0
          %v1476 = vsel %vm978, %v1452, 0
          %v1479 = vsel %vm978, %v1453, 0
          %v1482 = vsel %vm978, %v1454, 0
          %1484 = vmatprep.subr.mxu0 0.0
          %1485 = vmatpush1.msra.mxu0 0.0
          %1486 = vmatprep.subr.mxu0 0.0
          %1487 = vmatpush1.msra.mxu0 0.0
          %1488 = vmatprep.subr.mxu0 0.0
          %1489 = vmatpush1.msra.mxu0 0.0
          %1490 = vmatprep.subr.mxu0 0.0
          %1491 = vmatpush1.msra.mxu0 0.0
          %1492 = vmatprep.subr.mxu0 0.0
          %1493 = vmatpush1.msra.mxu0 0.0
          %1494 = vmatprep.subr.mxu0 0.0
          %1495 = vmatpush1.msra.mxu0 0.0
          %1496 = vmatprep.subr.mxu0 0.0
          %1497 = vmatpush1.msra.mxu0 0.0
          %1498 = vmatprep.subr.mxu0 0.0
          %1499 = vmatpush1.msra.mxu0 0.0
          %1500 = vmatprep.subr.mxu0 0.0
          %1501 = vmatpush1.msra.mxu0 0.0
          %1502 = vmatprep.subr.mxu0 0.0
          %1503 = vmatpush1.msra.mxu0 0.0
          %1504 = vmatprep.subr.mxu0 0.0
          %1505 = vmatpush1.msra.mxu0 0.0
          %1506 = vmatprep.subr.mxu0 0.0
          %1507 = vmatpush1.msra.mxu0 0.0
          %1508 = vmatprep.subr.mxu0 0.0
          %1509 = vmatpush1.msra.mxu0 %v1459
          %1510 = vmatprep.subr.mxu0 0.0
          %1511 = vmatpush1.msra.mxu0 %v1458
          %1512 = vmatprep.subr.mxu0 0.0
          %1513 = vmatpush1.msra.mxu0 %v1457
          %1514 = vmatprep.subr.mxu0 0.0
          %1515 = vmatpush1.msra.mxu0 %v1456
          %1516 = vmatprep.subr.mxu0 0.0
          %1517 = vmatpush2.msra.mxu0 0.0
          %1518 = vmatprep.subr.mxu0 0.0
          %1519 = vmatpush2.msra.mxu0 0.0
          %1520 = vmatprep.subr.mxu0 0.0
          %1521 = vmatpush2.msra.mxu0 0.0
          %1522 = vmatprep.subr.mxu0 0.0
          %1523 = vmatpush2.msra.mxu0 0.0
          %1524 = vmatprep.subr.mxu0 0.0
          %1525 = vmatpush2.msra.mxu0 0.0
          %1526 = vmatprep.subr.mxu0 0.0
          %1527 = vmatpush2.msra.mxu0 0.0
          %1528 = vmatprep.subr.mxu0 0.0
          %1529 = vmatpush2.msra.mxu0 0.0
          %1530 = vmatprep.subr.mxu0 0.0
          %1531 = vmatpush2.msra.mxu0 0.0
          %1532 = vmatprep.subr.mxu0 0.0
          %1533 = vmatpush2.msra.mxu0 0.0
          %1534 = vmatprep.subr.mxu0 0.0
          %1535 = vmatpush2.msra.mxu0 0.0
          %1536 = vmatprep.subr.mxu0 0.0
          %1537 = vmatpush2.msra.mxu0 0.0
          %1538 = vmatprep.subr.mxu0 0.0
          %1539 = vmatpush2.msra.mxu0 0.0
          %1540 = vmatprep.subr.mxu0 0.0
          %1541 = vmatpush2.msra.mxu0 0.0
          %1542 = vmatprep.subr.mxu0 0.0
          %1543 = vmatpush2.msra.mxu0 0.0
          %1544 = vmatprep.subr.mxu0 0.0
          %1545 = vmatpush2.msra.mxu0 0.0
          %1546 = vmatprep.subr.mxu0 0.0
          %1547 = vmatpush2.msra.mxu0 0.0
          %1548 = vmatprep.mubr.f32.mxu0 0.0
          %1549 = vmatmul.mubr.f32.gmra.mxu0 %v1461
          %v1550 = vpop.f32.mrf.mxu0
          %v1551 = vadd.f32 0.0, %v1550
          %v1552 = vpop.f32.mrf.mxu0
          %1553 = vmatprep.mubr.f32.mxu0 0.0
          %1554 = vmatmul.mubr.f32.gmra.mxu0 %v1464
          %v1555 = vpop.f32.mrf.mxu0
          %v1556 = vadd.f32 0.0, %v1555
          %v1557 = vpop.f32.mrf.mxu0
          %1558 = vmatprep.mubr.f32.mxu0 0.0
          %1559 = vmatmul.mubr.f32.gmra.mxu0 %v1467
          %v1560 = vpop.f32.mrf.mxu0
          %v1561 = vadd.f32 0.0, %v1560
          %v1562 = vpop.f32.mrf.mxu0
          %1563 = vmatprep.mubr.f32.mxu0 0.0
          %1564 = vmatmul.mubr.f32.gmra.mxu0 %v1470
          %v1565 = vpop.f32.mrf.mxu0
          %v1566 = vadd.f32 0.0, %v1565
          %v1567 = vpop.f32.mrf.mxu0
          %1568 = vmatprep.mubr.f32.mxu0 0.0
          %1569 = vmatmul.mubr.f32.gmra.mxu0 %v1473
          %v1570 = vpop.f32.mrf.mxu0
          %v1571 = vadd.f32 0.0, %v1570
          %v1572 = vpop.f32.mrf.mxu0
          %1573 = vmatprep.mubr.f32.mxu0 0.0
          %1574 = vmatmul.mubr.f32.gmra.mxu0 %v1476
          %v1575 = vpop.f32.mrf.mxu0
          %v1576 = vadd.f32 0.0, %v1575
          %v1577 = vpop.f32.mrf.mxu0
          %1578 = vmatprep.mubr.f32.mxu0 0.0
          %1579 = vmatmul.mubr.f32.gmra.mxu0 %v1479
          %v1580 = vpop.f32.mrf.mxu0
          %v1581 = vadd.f32 0.0, %v1580
          %v1582 = vpop.f32.mrf.mxu0
          %1583 = vmatprep.mubr.f32.mxu0 0.0
          %1584 = vmatmul.mubr.f32.gmra.mxu0 %v1482
          %v1585 = vpop.f32.mrf.mxu0
          %v1586 = vadd.f32 0.0, %v1585
          %v1587 = vpop.f32.mrf.mxu0
          %1588 = vdwg.mxu0
          %v1589 = vadd.f32 %v1431, %v1551
          %v1590 = vadd.f32 %v1432, %v1556
          %v1591 = vadd.f32 %v1433, %v1561
          %v1592 = vadd.f32 %v1434, %v1566
          %v1593 = vadd.f32 %v1435, %v1571
          %v1594 = vadd.f32 %v1436, %v1576
          %v1595 = vadd.f32 %v1437, %v1581
          %v1596 = vadd.f32 %v1438, %v1586
          %1597 = vst.msk [vmem:[%s713] sm:$0xff] %vm978, %v1589
          %1598 = vst.msk [vmem:[%s713 + $0x8] sm:$0xff] %vm978, %v1590
          %1599 = vst.msk [vmem:[%s713 + $0x10] sm:$0xff] %vm978, %v1591
          %1600 = vst.msk [vmem:[%s713 + $0x18] sm:$0xff] %vm978, %v1592
          %1601 = vst.msk [vmem:[%s713 + $0x20] sm:$0xff] %vm978, %v1593
          %1602 = vst.msk [vmem:[%s713 + $0x28] sm:$0xff] %vm978, %v1594
          %1603 = vst.msk [vmem:[%s713 + $0x30] sm:$0xff] %vm978, %v1595
          %1604 = vst.msk [vmem:[%s713 + $0x38] sm:$0xff] %vm978, %v1596
        $region204: #{hl_layer_forward.1} parent=179 // pred_fallthru
          _
        %s1605 = smul.u32 8, %s22
        %p1606 = scmp.lt.s32.totalorder %s1605, 31
        %s1607 = scalar_select %p1606, %s1605, 31
        %s1608 = smul.addr %s1607, 8
        %s1609 = scalar_lea.vmem %s7, %s1608
        // Predicated region
        $region205: #{hl_layer_forward.1} parent=179 // pred_check
          %p1610 = pneg %p222
        $region206: #{hl_layer_forward.1} parent=179 // pred_check_branch
          %1612 = sbr.rel (%p1610) target = $region208
        $region207: #{hl_layer_forward.1} parent=179 // pred_region
          %s1613 = smul.u32 8, %s22
        $region208: #{hl_layer_forward.1} parent=179 // pred_fallthru
          _
      $region180: #{hl_layer_forward.1} parent=5 // pred_fallthru
        _
      %p1614 = scmp.le.s32.totalorder 2, %s13
      // Predicated region
      $region209: #{hl_layer_forward.1} parent=5 // pred_check
        %p1615 = pneg %p1614
      $region210: #{hl_layer_forward.1} parent=5 // pred_check_branch
        %1617 = sbr.rel (%p1615) target = $region212
      $region211: #{hl_layer_forward.1} parent=5 // pred_region
        %s1618 = ssub.s32 %s13, 2
        // Predicated region
        $region213: #{hl_layer_forward.1} parent=211 // pred_check
          %p1619 = pneg %p228
        $region214: #{hl_layer_forward.1} parent=211 // pred_check_branch
          %1621 = sbr.rel (%p1619) target = $region216
        $region215: #{hl_layer_forward.1} parent=211 // pred_region
          %s1622 = smul.u32 8, %s24
          %p1623 = scmp.lt.s32.totalorder %s1622, 31
          %s1624 = scalar_select %p1623, %s1622, 31
          %s1625 = smul.addr %s1624, 8
          %s1626 = scalar_lea.vmem %s7, %s1625
        $region216: #{hl_layer_forward.1} parent=211 // pred_fallthru
          _
      $region212: #{hl_layer_forward.1} parent=5 // pred_fallthru
        _
    $region6: #{hl_layer_forward.1} parent=1 // loop_footer
      %s17 = sadd.s32 1, %s13
    $region7: #{hl_layer_forward.1} parent=1 // loop_footer_branch
      %12 = sbr.rel target = $region3
    $region8: #{hl_layer_forward.1} parent=1 // loop_exit
      _

</llo_original>
